<compile_context>
chip_gen: v5e
topology: v5e:2x2
jax: 0.10.0
libtpu: 0.0.40
codegen_flags: <defaults>
</compile_context>

<pallas_src>
import jax
import jax.numpy as jnp
from jax.experimental import pallas as pl
from jax.experimental.pallas import tpu as pltpu


# ----------------------------------------------------------------------------
# Fused kernel
# ----------------------------------------------------------------------------
def _make_sgblock_kernel(H, W, C, R):
    HW = H * W

    def reflect_pad(a):
        # 1-px reflection pad (H, W, c) -> (H+2, W+2, c); matches
        # torch.nn.ReflectionPad2d(1) (edge row/col not repeated).
        a = jnp.concatenate([a[1:2], a, a[H - 2:H - 1]], axis=0)
        a = jnp.concatenate([a[:, 1:2], a, a[:, W - 2:W - 1]], axis=1)
        return a

    def kernel(x_ref, w1_ref, b1_ref, w2a_ref, b2a_ref, w2b_ref, b2b_ref,
               out_ref, patch_ref):

        def conv3x3(xp, w_bf16, b, cin):
            # im2col: write the 9 shifted taps ONCE into the shared bf16
            # scratch, then a single K = 9*cin MXU matmul with f32 accum.
            for ky in range(3):
                rows = xp[ky:ky + H]                        # (H, W+2, cin)
                for kx in range(3):
                    tap = rows[:, kx:kx + W, :].reshape(HW, cin)
                    c0 = (ky * 3 + kx) * cin
                    patch_ref[:, c0:c0 + cin] = tap.astype(jnp.bfloat16)
            patch = patch_ref[:, :9 * cin]                  # (HW, 9*cin) bf16
            return jnp.dot(patch, w_bf16,
                           preferred_element_type=jnp.float32) + b

        x = x_ref[0].astype(jnp.float32)                    # (H, W, C)

        # conv1: LeakyReLU(0.2) -> ReflectionPad(1) -> Conv3x3
        lx = jnp.where(x >= 0.0, x, 0.2 * x)
        res = conv3x3(reflect_pad(lx), w1_ref[...], b1_ref[...], C)  # (HW, C)

        # conv2 stage a: ReflectionPad(1) -> Conv3x3 -> ReLU
        t = jnp.maximum(
            conv3x3(reflect_pad(res.reshape(H, W, C)),
                    w2a_ref[...], b2a_ref[...], C), 0.0)              # (HW, R)

        # conv2 stage b: ReflectionPad(1) -> Conv3x3 -> Sigmoid, then *res + x
        g = jax.nn.sigmoid(
            conv3x3(reflect_pad(t.reshape(H, W, R)),
                    w2b_ref[...], b2b_ref[...], R))                   # (HW, C)

        out_ref[0] = (g * res + x.reshape(HW, C)).astype(out_ref.dtype)

    return kernel


# ----------------------------------------------------------------------------
# pallas_call wrapper
# ----------------------------------------------------------------------------
@jax.jit
def sgblock_forward(x, params):
    """SGBlock forward.  x: (N, H, W, C) float32 (NHWC)."""
    w1, b1, w2a, b2a, w2b, b2b = params
    N, H, W, C = x.shape
    R = w2a.shape[-1]
    HW = H * W

    # (3, 3, Cin, Cout) -> (9*Cin, Cout), bf16 for the MXU (f32 accumulation).
    w1m = w1.reshape(9 * C, C).astype(jnp.bfloat16)
    w2am = w2a.reshape(9 * C, R).astype(jnp.bfloat16)
    w2bm = w2b.reshape(9 * R, C).astype(jnp.bfloat16)

    flops = 2 * N * H * W * 9 * (C * C + C * R + R * C)
    bytes_accessed = (2 * N * H * W * C) * 4 \
        + 2 * (w1m.size + w2am.size + w2bm.size) \
        + 4 * (b1.size + b2a.size + b2b.size)

    kernel = _make_sgblock_kernel(H, W, C, R)
    out = pl.pallas_call(
        kernel,
        out_shape=jax.ShapeDtypeStruct((N, HW, C), jnp.float32),
        grid=(N,),
        in_specs=[
            pl.BlockSpec((1, H, W, C), lambda n: (n, 0, 0, 0)),   # x
            pl.BlockSpec((9 * C, C), lambda n: (0, 0)),           # w1
            pl.BlockSpec((1, C), lambda n: (0, 0)),               # b1
            pl.BlockSpec((9 * C, R), lambda n: (0, 0)),           # w2a
            pl.BlockSpec((1, R), lambda n: (0, 0)),               # b2a
            pl.BlockSpec((9 * R, C), lambda n: (0, 0)),           # w2b
            pl.BlockSpec((1, C), lambda n: (0, 0)),               # b2b
        ],
        out_specs=pl.BlockSpec((1, HW, C), lambda n: (n, 0, 0)),
        scratch_shapes=[pltpu.VMEM((HW, 9 * C), jnp.bfloat16)],   # im2col buf
        compiler_params=pltpu.CompilerParams(
            dimension_semantics=("parallel",),
            vmem_limit_bytes=32 * 1024 * 1024),
        cost_estimate=pl.CostEstimate(
            flops=flops,
            transcendentals=N * H * W * C,
            bytes_accessed=bytes_accessed),
    )(x, w1m, b1.reshape(1, C), w2am, b2a.reshape(1, R),
      w2bm, b2b.reshape(1, C))

    return out.reshape(N, H, W, C)


# ----------------------------------------------------------------------------
# Pure-JAX reference (f32, for a correctness sanity check)
# ----------------------------------------------------------------------------
def _reflect_pad(x, p=1):
    return jnp.pad(x, ((0, 0), (p, p), (p, p), (0, 0)), mode="reflect")


def _conv3x3_ref(xpad, w, b):
    return jax.lax.conv_general_dilated(
        xpad, w, window_strides=(1, 1), padding="VALID",
        dimension_numbers=("NHWC", "HWIO", "NHWC")) + b


def sgblock_ref(x, params):
    w1, b1, w2a, b2a, w2b, b2b = params
    lx = jnp.where(x >= 0.0, x, 0.2 * x)
    res = _conv3x3_ref(_reflect_pad(lx), w1, b1)
    t = jnp.maximum(_conv3x3_ref(_reflect_pad(res), w2a, b2a), 0.0)
    gate = jax.nn.sigmoid(_conv3x3_ref(_reflect_pad(t), w2b, b2b))
    return gate * res + x


# ----------------------------------------------------------------------------
# Main
# ----------------------------------------------------------------------------
if __name__ == "__main__":
    # Small shapes consistent with the module (dim, reduction scaled down).
    N, H, W = 2, 8, 8
    DIM, RED = 32, 8

    key = jax.random.PRNGKey(0)
    ks = jax.random.split(key, 7)
    x = jax.random.normal(ks[0], (N, H, W, DIM), jnp.float32)

    # HWIO weights (nn.Conv2d [Cout, Cin, 3, 3] transposed to [3, 3, Cin, Cout]).
    w1 = jax.random.normal(ks[1], (3, 3, DIM, DIM), jnp.float32) * 0.05
    b1 = jax.random.normal(ks[2], (DIM,), jnp.float32) * 0.05
    w2a = jax.random.normal(ks[3], (3, 3, DIM, RED), jnp.float32) * 0.05
    b2a = jax.random.normal(ks[4], (RED,), jnp.float32) * 0.05
    w2b = jax.random.normal(ks[5], (3, 3, RED, DIM), jnp.float32) * 0.05
    b2b = jax.random.normal(ks[6], (DIM,), jnp.float32) * 0.05
    params = (w1, b1, w2a, b2a, w2b, b2b)

    out = sgblock_forward(x, params)
    out = jax.block_until_ready(out)

    ref = sgblock_ref(x, params)
    assert out.shape == (N, H, W, DIM)
    # bf16 MXU inputs (f32 accumulation) -> slightly looser tolerance vs f32 ref.
    err = float(jnp.max(jnp.abs(out - ref)))
    assert jnp.allclose(out, ref, atol=3e-2, rtol=3e-2), err

    print("KERNEL_OK")
</pallas_src>

<mosaic_0001>
module attributes {stable_mosaic.version = 11 : i64} {
  func.func @kernel(%arg0: i32, %arg1: memref<1x8x8x32xf32, #tpu.memory_space<vmem>>, %arg2: memref<288x32xbf16, #tpu.memory_space<vmem>>, %arg3: memref<1x32xf32, #tpu.memory_space<vmem>>, %arg4: memref<288x8xbf16, #tpu.memory_space<vmem>>, %arg5: memref<1x8xf32, #tpu.memory_space<vmem>>, %arg6: memref<72x32xbf16, #tpu.memory_space<vmem>>, %arg7: memref<1x32xf32, #tpu.memory_space<vmem>>, %arg8: memref<1x64x32xf32, #tpu.memory_space<vmem>>, %arg9: memref<64x288xbf16, #tpu.memory_space<vmem>>) attributes {dimension_semantics = [#tpu.dimension_semantics<parallel>], iteration_bounds = array<i64: 2>, scalar_prefetch = 0 : i64, scratch_operands = 1 : i64, tpu.core_type = #tpu.core_type<tc>, window_params = [{transform_indices = @transform_0, window_bounds = array<i64: 1, 8, 8, 32>}, {pipeline_mode = #tpu.pipeline_mode<synchronous>, transform_indices = @transform_1, window_bounds = array<i64: 288, 32>}, {pipeline_mode = #tpu.pipeline_mode<synchronous>, transform_indices = @transform_2, window_bounds = array<i64: 1, 32>}, {pipeline_mode = #tpu.pipeline_mode<synchronous>, transform_indices = @transform_3, window_bounds = array<i64: 288, 8>}, {pipeline_mode = #tpu.pipeline_mode<synchronous>, transform_indices = @transform_4, window_bounds = array<i64: 1, 8>}, {pipeline_mode = #tpu.pipeline_mode<synchronous>, transform_indices = @transform_5, window_bounds = array<i64: 72, 32>}, {pipeline_mode = #tpu.pipeline_mode<synchronous>, transform_indices = @transform_6, window_bounds = array<i64: 1, 32>}, {transform_indices = @transform_7, window_bounds = array<i64: 1, 64, 32>}]} {
    %c0 = arith.constant 0 : index
    %c0_0 = arith.constant 0 : index
    %c0_1 = arith.constant 0 : index
    %c0_2 = arith.constant 0 : index
    %0 = vector.load %arg1[%c0, %c0_0, %c0_1, %c0_2] : memref<1x8x8x32xf32, #tpu.memory_space<vmem>>, vector<1x8x8x32xf32>
    %1 = vector.shape_cast %0 : vector<1x8x8x32xf32> to vector<8x8x32xf32>
    %cst = arith.constant 0.000000e+00 : f32
    %2 = vector.broadcast %cst : f32 to vector<8x8x32xf32>
    %3 = arith.cmpf oge, %1, %2 : vector<8x8x32xf32>
    %cst_3 = arith.constant 2.000000e-01 : f32
    %4 = vector.broadcast %cst_3 : f32 to vector<8x8x32xf32>
    %5 = arith.mulf %4, %1 : vector<8x8x32xf32>
    %6 = arith.select %3, %1, %5 : vector<8x8x32xi1>, vector<8x8x32xf32>
    %7 = vector.extract_strided_slice %6 {offsets = [1, 0, 0], sizes = [1, 8, 32], strides = [1, 1, 1]} : vector<8x8x32xf32> to vector<1x8x32xf32>
    %8 = vector.extract_strided_slice %6 {offsets = [6, 0, 0], sizes = [1, 8, 32], strides = [1, 1, 1]} : vector<8x8x32xf32> to vector<1x8x32xf32>
    %9 = tpu.concatenate %7, %6, %8 in 0 : vector<1x8x32xf32>, vector<8x8x32xf32>, vector<1x8x32xf32> -> vector<10x8x32xf32>
    %10 = vector.extract_strided_slice %9 {offsets = [0, 1, 0], sizes = [10, 1, 32], strides = [1, 1, 1]} : vector<10x8x32xf32> to vector<10x1x32xf32>
    %11 = vector.extract_strided_slice %9 {offsets = [0, 6, 0], sizes = [10, 1, 32], strides = [1, 1, 1]} : vector<10x8x32xf32> to vector<10x1x32xf32>
    %12 = tpu.concatenate %10, %9, %11 in 1 : vector<10x1x32xf32>, vector<10x8x32xf32>, vector<10x1x32xf32> -> vector<10x10x32xf32>
    %c0_4 = arith.constant 0 : index
    %c0_5 = arith.constant 0 : index
    %13 = vector.load %arg2[%c0_4, %c0_5] : memref<288x32xbf16, #tpu.memory_space<vmem>>, vector<288x32xbf16>
    %c0_6 = arith.constant 0 : index
    %c0_7 = arith.constant 0 : index
    %14 = vector.load %arg3[%c0_6, %c0_7] : memref<1x32xf32, #tpu.memory_space<vmem>>, vector<1x32xf32>
    %15 = vector.extract_strided_slice %12 {offsets = [0, 0, 0], sizes = [8, 10, 32], strides = [1, 1, 1]} : vector<10x10x32xf32> to vector<8x10x32xf32>
    %16 = vector.extract_strided_slice %15 {offsets = [0, 0, 0], sizes = [8, 8, 32], strides = [1, 1, 1]} : vector<8x10x32xf32> to vector<8x8x32xf32>
    %17 = vector.shape_cast %16 : vector<8x8x32xf32> to vector<64x32xf32>
    %18 = arith.truncf %17 : vector<64x32xf32> to vector<64x32xbf16>
    %c0_8 = arith.constant 0 : index
    %c0_9 = arith.constant 0 : index
    %19 = vector.load %arg9[%c0_8, %c0_9] : memref<64x288xbf16, #tpu.memory_space<vmem>>, vector<64x32xbf16>
    tpu.vector_store %arg9[%c0_8, %c0_9], %18 {strides = array<i32>} : memref<64x288xbf16, #tpu.memory_space<vmem>>, vector<64x32xbf16>,
    %20 = vector.extract_strided_slice %15 {offsets = [0, 1, 0], sizes = [8, 8, 32], strides = [1, 1, 1]} : vector<8x10x32xf32> to vector<8x8x32xf32>
    %21 = vector.shape_cast %20 : vector<8x8x32xf32> to vector<64x32xf32>
    %22 = arith.truncf %21 : vector<64x32xf32> to vector<64x32xbf16>
    %c0_10 = arith.constant 0 : index
    %c32 = arith.constant 32 : index
    %23 = vector.load %arg9[%c0_10, %c32] : memref<64x288xbf16, #tpu.memory_space<vmem>>, vector<64x32xbf16>
    tpu.vector_store %arg9[%c0_10, %c32], %22 {strides = array<i32>} : memref<64x288xbf16, #tpu.memory_space<vmem>>, vector<64x32xbf16>,
    %24 = vector.extract_strided_slice %15 {offsets = [0, 2, 0], sizes = [8, 8, 32], strides = [1, 1, 1]} : vector<8x10x32xf32> to vector<8x8x32xf32>
    %25 = vector.shape_cast %24 : vector<8x8x32xf32> to vector<64x32xf32>
    %26 = arith.truncf %25 : vector<64x32xf32> to vector<64x32xbf16>
    %c0_11 = arith.constant 0 : index
    %c64 = arith.constant 64 : index
    %27 = vector.load %arg9[%c0_11, %c64] : memref<64x288xbf16, #tpu.memory_space<vmem>>, vector<64x32xbf16>
    tpu.vector_store %arg9[%c0_11, %c64], %26 {strides = array<i32>} : memref<64x288xbf16, #tpu.memory_space<vmem>>, vector<64x32xbf16>,
    %28 = vector.extract_strided_slice %12 {offsets = [1, 0, 0], sizes = [8, 10, 32], strides = [1, 1, 1]} : vector<10x10x32xf32> to vector<8x10x32xf32>
    %29 = vector.extract_strided_slice %28 {offsets = [0, 0, 0], sizes = [8, 8, 32], strides = [1, 1, 1]} : vector<8x10x32xf32> to vector<8x8x32xf32>
    %30 = vector.shape_cast %29 : vector<8x8x32xf32> to vector<64x32xf32>
    %31 = arith.truncf %30 : vector<64x32xf32> to vector<64x32xbf16>
    %c0_12 = arith.constant 0 : index
    %c96 = arith.constant 96 : index
    %32 = vector.load %arg9[%c0_12, %c96] : memref<64x288xbf16, #tpu.memory_space<vmem>>, vector<64x32xbf16>
    tpu.vector_store %arg9[%c0_12, %c96], %31 {strides = array<i32>} : memref<64x288xbf16, #tpu.memory_space<vmem>>, vector<64x32xbf16>,
    %33 = vector.extract_strided_slice %28 {offsets = [0, 1, 0], sizes = [8, 8, 32], strides = [1, 1, 1]} : vector<8x10x32xf32> to vector<8x8x32xf32>
    %34 = vector.shape_cast %33 : vector<8x8x32xf32> to vector<64x32xf32>
    %35 = arith.truncf %34 : vector<64x32xf32> to vector<64x32xbf16>
    %c0_13 = arith.constant 0 : index
    %c128 = arith.constant 128 : index
    %36 = vector.load %arg9[%c0_13, %c128] : memref<64x288xbf16, #tpu.memory_space<vmem>>, vector<64x32xbf16>
    tpu.vector_store %arg9[%c0_13, %c128], %35 {strides = array<i32>} : memref<64x288xbf16, #tpu.memory_space<vmem>>, vector<64x32xbf16>,
    %37 = vector.extract_strided_slice %28 {offsets = [0, 2, 0], sizes = [8, 8, 32], strides = [1, 1, 1]} : vector<8x10x32xf32> to vector<8x8x32xf32>
    %38 = vector.shape_cast %37 : vector<8x8x32xf32> to vector<64x32xf32>
    %39 = arith.truncf %38 : vector<64x32xf32> to vector<64x32xbf16>
    %c0_14 = arith.constant 0 : index
    %c160 = arith.constant 160 : index
    %40 = vector.load %arg9[%c0_14, %c160] : memref<64x288xbf16, #tpu.memory_space<vmem>>, vector<64x32xbf16>
    tpu.vector_store %arg9[%c0_14, %c160], %39 {strides = array<i32>} : memref<64x288xbf16, #tpu.memory_space<vmem>>, vector<64x32xbf16>,
    %41 = vector.extract_strided_slice %12 {offsets = [2, 0, 0], sizes = [8, 10, 32], strides = [1, 1, 1]} : vector<10x10x32xf32> to vector<8x10x32xf32>
    %42 = vector.extract_strided_slice %41 {offsets = [0, 0, 0], sizes = [8, 8, 32], strides = [1, 1, 1]} : vector<8x10x32xf32> to vector<8x8x32xf32>
    %43 = vector.shape_cast %42 : vector<8x8x32xf32> to vector<64x32xf32>
    %44 = arith.truncf %43 : vector<64x32xf32> to vector<64x32xbf16>
    %c0_15 = arith.constant 0 : index
    %c192 = arith.constant 192 : index
    %45 = vector.load %arg9[%c0_15, %c192] : memref<64x288xbf16, #tpu.memory_space<vmem>>, vector<64x32xbf16>
    tpu.vector_store %arg9[%c0_15, %c192], %44 {strides = array<i32>} : memref<64x288xbf16, #tpu.memory_space<vmem>>, vector<64x32xbf16>,
    %46 = vector.extract_strided_slice %41 {offsets = [0, 1, 0], sizes = [8, 8, 32], strides = [1, 1, 1]} : vector<8x10x32xf32> to vector<8x8x32xf32>
    %47 = vector.shape_cast %46 : vector<8x8x32xf32> to vector<64x32xf32>
    %48 = arith.truncf %47 : vector<64x32xf32> to vector<64x32xbf16>
    %c0_16 = arith.constant 0 : index
    %c224 = arith.constant 224 : index
    %49 = vector.load %arg9[%c0_16, %c224] : memref<64x288xbf16, #tpu.memory_space<vmem>>, vector<64x32xbf16>
    tpu.vector_store %arg9[%c0_16, %c224], %48 {strides = array<i32>} : memref<64x288xbf16, #tpu.memory_space<vmem>>, vector<64x32xbf16>,
    %50 = vector.extract_strided_slice %41 {offsets = [0, 2, 0], sizes = [8, 8, 32], strides = [1, 1, 1]} : vector<8x10x32xf32> to vector<8x8x32xf32>
    %51 = vector.shape_cast %50 : vector<8x8x32xf32> to vector<64x32xf32>
    %52 = arith.truncf %51 : vector<64x32xf32> to vector<64x32xbf16>
    %c0_17 = arith.constant 0 : index
    %c256 = arith.constant 256 : index
    %53 = vector.load %arg9[%c0_17, %c256] : memref<64x288xbf16, #tpu.memory_space<vmem>>, vector<64x32xbf16>
    tpu.vector_store %arg9[%c0_17, %c256], %52 {strides = array<i32>} : memref<64x288xbf16, #tpu.memory_space<vmem>>, vector<64x32xbf16>,
    %c0_18 = arith.constant 0 : index
    %c0_19 = arith.constant 0 : index
    %54 = vector.load %arg9[%c0_18, %c0_19] : memref<64x288xbf16, #tpu.memory_space<vmem>>, vector<64x288xbf16>
    %cst_20 = arith.constant dense<0.000000e+00> : vector<64x32xf32>
    %55 = tpu.matmul %54, %13, %cst_20 {dimension_numbers = #tpu.dot_dimension_numbers<[1], [0], [0], [1], [0, 0, 1, 1], [], []>} : vector<64x288xbf16>, vector<288x32xbf16>, vector<64x32xf32> -> vector<64x32xf32>
    %56 = vector.broadcast %14 : vector<1x32xf32> to vector<64x32xf32>
    %57 = arith.addf %55, %56 : vector<64x32xf32>
    %58 = vector.shape_cast %57 : vector<64x32xf32> to vector<8x8x32xf32>
    %59 = vector.extract_strided_slice %58 {offsets = [1, 0, 0], sizes = [1, 8, 32], strides = [1, 1, 1]} : vector<8x8x32xf32> to vector<1x8x32xf32>
    %60 = vector.extract_strided_slice %58 {offsets = [6, 0, 0], sizes = [1, 8, 32], strides = [1, 1, 1]} : vector<8x8x32xf32> to vector<1x8x32xf32>
    %61 = tpu.concatenate %59, %58, %60 in 0 : vector<1x8x32xf32>, vector<8x8x32xf32>, vector<1x8x32xf32> -> vector<10x8x32xf32>
    %62 = vector.extract_strided_slice %61 {offsets = [0, 1, 0], sizes = [10, 1, 32], strides = [1, 1, 1]} : vector<10x8x32xf32> to vector<10x1x32xf32>
    %63 = vector.extract_strided_slice %61 {offsets = [0, 6, 0], sizes = [10, 1, 32], strides = [1, 1, 1]} : vector<10x8x32xf32> to vector<10x1x32xf32>
    %64 = tpu.concatenate %62, %61, %63 in 1 : vector<10x1x32xf32>, vector<10x8x32xf32>, vector<10x1x32xf32> -> vector<10x10x32xf32>
    %c0_21 = arith.constant 0 : index
    %c0_22 = arith.constant 0 : index
    %65 = vector.load %arg4[%c0_21, %c0_22] : memref<288x8xbf16, #tpu.memory_space<vmem>>, vector<288x8xbf16>
    %c0_23 = arith.constant 0 : index
    %c0_24 = arith.constant 0 : index
    %66 = vector.load %arg5[%c0_23, %c0_24] : memref<1x8xf32, #tpu.memory_space<vmem>>, vector<1x8xf32>
    %67 = vector.extract_strided_slice %64 {offsets = [0, 0, 0], sizes = [8, 10, 32], strides = [1, 1, 1]} : vector<10x10x32xf32> to vector<8x10x32xf32>
    %68 = vector.extract_strided_slice %67 {offsets = [0, 0, 0], sizes = [8, 8, 32], strides = [1, 1, 1]} : vector<8x10x32xf32> to vector<8x8x32xf32>
    %69 = vector.shape_cast %68 : vector<8x8x32xf32> to vector<64x32xf32>
    %70 = arith.truncf %69 : vector<64x32xf32> to vector<64x32xbf16>
    %c0_25 = arith.constant 0 : index
    %c0_26 = arith.constant 0 : index
    %71 = vector.load %arg9[%c0_25, %c0_26] : memref<64x288xbf16, #tpu.memory_space<vmem>>, vector<64x32xbf16>
    tpu.vector_store %arg9[%c0_25, %c0_26], %70 {strides = array<i32>} : memref<64x288xbf16, #tpu.memory_space<vmem>>, vector<64x32xbf16>,
    %72 = vector.extract_strided_slice %67 {offsets = [0, 1, 0], sizes = [8, 8, 32], strides = [1, 1, 1]} : vector<8x10x32xf32> to vector<8x8x32xf32>
    %73 = vector.shape_cast %72 : vector<8x8x32xf32> to vector<64x32xf32>
    %74 = arith.truncf %73 : vector<64x32xf32> to vector<64x32xbf16>
    %c0_27 = arith.constant 0 : index
    %c32_28 = arith.constant 32 : index
    %75 = vector.load %arg9[%c0_27, %c32_28] : memref<64x288xbf16, #tpu.memory_space<vmem>>, vector<64x32xbf16>
    tpu.vector_store %arg9[%c0_27, %c32_28], %74 {strides = array<i32>} : memref<64x288xbf16, #tpu.memory_space<vmem>>, vector<64x32xbf16>,
    %76 = vector.extract_strided_slice %67 {offsets = [0, 2, 0], sizes = [8, 8, 32], strides = [1, 1, 1]} : vector<8x10x32xf32> to vector<8x8x32xf32>
    %77 = vector.shape_cast %76 : vector<8x8x32xf32> to vector<64x32xf32>
    %78 = arith.truncf %77 : vector<64x32xf32> to vector<64x32xbf16>
    %c0_29 = arith.constant 0 : index
    %c64_30 = arith.constant 64 : index
    %79 = vector.load %arg9[%c0_29, %c64_30] : memref<64x288xbf16, #tpu.memory_space<vmem>>, vector<64x32xbf16>
    tpu.vector_store %arg9[%c0_29, %c64_30], %78 {strides = array<i32>} : memref<64x288xbf16, #tpu.memory_space<vmem>>, vector<64x32xbf16>,
    %80 = vector.extract_strided_slice %64 {offsets = [1, 0, 0], sizes = [8, 10, 32], strides = [1, 1, 1]} : vector<10x10x32xf32> to vector<8x10x32xf32>
    %81 = vector.extract_strided_slice %80 {offsets = [0, 0, 0], sizes = [8, 8, 32], strides = [1, 1, 1]} : vector<8x10x32xf32> to vector<8x8x32xf32>
    %82 = vector.shape_cast %81 : vector<8x8x32xf32> to vector<64x32xf32>
    %83 = arith.truncf %82 : vector<64x32xf32> to vector<64x32xbf16>
    %c0_31 = arith.constant 0 : index
    %c96_32 = arith.constant 96 : index
    %84 = vector.load %arg9[%c0_31, %c96_32] : memref<64x288xbf16, #tpu.memory_space<vmem>>, vector<64x32xbf16>
    tpu.vector_store %arg9[%c0_31, %c96_32], %83 {strides = array<i32>} : memref<64x288xbf16, #tpu.memory_space<vmem>>, vector<64x32xbf16>,
    %85 = vector.extract_strided_slice %80 {offsets = [0, 1, 0], sizes = [8, 8, 32], strides = [1, 1, 1]} : vector<8x10x32xf32> to vector<8x8x32xf32>
    %86 = vector.shape_cast %85 : vector<8x8x32xf32> to vector<64x32xf32>
    %87 = arith.truncf %86 : vector<64x32xf32> to vector<64x32xbf16>
    %c0_33 = arith.constant 0 : index
    %c128_34 = arith.constant 128 : index
    %88 = vector.load %arg9[%c0_33, %c128_34] : memref<64x288xbf16, #tpu.memory_space<vmem>>, vector<64x32xbf16>
    tpu.vector_store %arg9[%c0_33, %c128_34], %87 {strides = array<i32>} : memref<64x288xbf16, #tpu.memory_space<vmem>>, vector<64x32xbf16>,
    %89 = vector.extract_strided_slice %80 {offsets = [0, 2, 0], sizes = [8, 8, 32], strides = [1, 1, 1]} : vector<8x10x32xf32> to vector<8x8x32xf32>
    %90 = vector.shape_cast %89 : vector<8x8x32xf32> to vector<64x32xf32>
    %91 = arith.truncf %90 : vector<64x32xf32> to vector<64x32xbf16>
    %c0_35 = arith.constant 0 : index
    %c160_36 = arith.constant 160 : index
    %92 = vector.load %arg9[%c0_35, %c160_36] : memref<64x288xbf16, #tpu.memory_space<vmem>>, vector<64x32xbf16>
    tpu.vector_store %arg9[%c0_35, %c160_36], %91 {strides = array<i32>} : memref<64x288xbf16, #tpu.memory_space<vmem>>, vector<64x32xbf16>,
    %93 = vector.extract_strided_slice %64 {offsets = [2, 0, 0], sizes = [8, 10, 32], strides = [1, 1, 1]} : vector<10x10x32xf32> to vector<8x10x32xf32>
    %94 = vector.extract_strided_slice %93 {offsets = [0, 0, 0], sizes = [8, 8, 32], strides = [1, 1, 1]} : vector<8x10x32xf32> to vector<8x8x32xf32>
    %95 = vector.shape_cast %94 : vector<8x8x32xf32> to vector<64x32xf32>
    %96 = arith.truncf %95 : vector<64x32xf32> to vector<64x32xbf16>
    %c0_37 = arith.constant 0 : index
    %c192_38 = arith.constant 192 : index
    %97 = vector.load %arg9[%c0_37, %c192_38] : memref<64x288xbf16, #tpu.memory_space<vmem>>, vector<64x32xbf16>
    tpu.vector_store %arg9[%c0_37, %c192_38], %96 {strides = array<i32>} : memref<64x288xbf16, #tpu.memory_space<vmem>>, vector<64x32xbf16>,
    %98 = vector.extract_strided_slice %93 {offsets = [0, 1, 0], sizes = [8, 8, 32], strides = [1, 1, 1]} : vector<8x10x32xf32> to vector<8x8x32xf32>
    %99 = vector.shape_cast %98 : vector<8x8x32xf32> to vector<64x32xf32>
    %100 = arith.truncf %99 : vector<64x32xf32> to vector<64x32xbf16>
    %c0_39 = arith.constant 0 : index
    %c224_40 = arith.constant 224 : index
    %101 = vector.load %arg9[%c0_39, %c224_40] : memref<64x288xbf16, #tpu.memory_space<vmem>>, vector<64x32xbf16>
    tpu.vector_store %arg9[%c0_39, %c224_40], %100 {strides = array<i32>} : memref<64x288xbf16, #tpu.memory_space<vmem>>, vector<64x32xbf16>,
    %102 = vector.extract_strided_slice %93 {offsets = [0, 2, 0], sizes = [8, 8, 32], strides = [1, 1, 1]} : vector<8x10x32xf32> to vector<8x8x32xf32>
    %103 = vector.shape_cast %102 : vector<8x8x32xf32> to vector<64x32xf32>
    %104 = arith.truncf %103 : vector<64x32xf32> to vector<64x32xbf16>
    %c0_41 = arith.constant 0 : index
    %c256_42 = arith.constant 256 : index
    %105 = vector.load %arg9[%c0_41, %c256_42] : memref<64x288xbf16, #tpu.memory_space<vmem>>, vector<64x32xbf16>
    tpu.vector_store %arg9[%c0_41, %c256_42], %104 {strides = array<i32>} : memref<64x288xbf16, #tpu.memory_space<vmem>>, vector<64x32xbf16>,
    %c0_43 = arith.constant 0 : index
    %c0_44 = arith.constant 0 : index
    %106 = vector.load %arg9[%c0_43, %c0_44] : memref<64x288xbf16, #tpu.memory_space<vmem>>, vector<64x288xbf16>
    %cst_45 = arith.constant dense<0.000000e+00> : vector<64x8xf32>
    %107 = tpu.matmul %106, %65, %cst_45 {dimension_numbers = #tpu.dot_dimension_numbers<[1], [0], [0], [1], [0, 0, 1, 1], [], []>} : vector<64x288xbf16>, vector<288x8xbf16>, vector<64x8xf32> -> vector<64x8xf32>
    %108 = vector.broadcast %66 : vector<1x8xf32> to vector<64x8xf32>
    %109 = arith.addf %107, %108 : vector<64x8xf32>
    %cst_46 = arith.constant 0.000000e+00 : f32
    %110 = vector.broadcast %cst_46 : f32 to vector<64x8xf32>
    %111 = arith.maximumf %109, %110 : vector<64x8xf32>
    %112 = vector.shape_cast %111 : vector<64x8xf32> to vector<8x8x8xf32>
    %113 = vector.extract_strided_slice %112 {offsets = [1, 0, 0], sizes = [1, 8, 8], strides = [1, 1, 1]} : vector<8x8x8xf32> to vector<1x8x8xf32>
    %114 = vector.extract_strided_slice %112 {offsets = [6, 0, 0], sizes = [1, 8, 8], strides = [1, 1, 1]} : vector<8x8x8xf32> to vector<1x8x8xf32>
    %115 = tpu.concatenate %113, %112, %114 in 0 : vector<1x8x8xf32>, vector<8x8x8xf32>, vector<1x8x8xf32> -> vector<10x8x8xf32>
    %116 = vector.extract_strided_slice %115 {offsets = [0, 1, 0], sizes = [10, 1, 8], strides = [1, 1, 1]} : vector<10x8x8xf32> to vector<10x1x8xf32>
    %117 = vector.extract_strided_slice %115 {offsets = [0, 6, 0], sizes = [10, 1, 8], strides = [1, 1, 1]} : vector<10x8x8xf32> to vector<10x1x8xf32>
    %118 = tpu.concatenate %116, %115, %117 in 1 : vector<10x1x8xf32>, vector<10x8x8xf32>, vector<10x1x8xf32> -> vector<10x10x8xf32>
    %c0_47 = arith.constant 0 : index
    %c0_48 = arith.constant 0 : index
    %119 = vector.load %arg6[%c0_47, %c0_48] : memref<72x32xbf16, #tpu.memory_space<vmem>>, vector<72x32xbf16>
    %c0_49 = arith.constant 0 : index
    %c0_50 = arith.constant 0 : index
    %120 = vector.load %arg7[%c0_49, %c0_50] : memref<1x32xf32, #tpu.memory_space<vmem>>, vector<1x32xf32>
    %121 = vector.extract_strided_slice %118 {offsets = [0, 0, 0], sizes = [8, 10, 8], strides = [1, 1, 1]} : vector<10x10x8xf32> to vector<8x10x8xf32>
    %122 = vector.extract_strided_slice %121 {offsets = [0, 0, 0], sizes = [8, 8, 8], strides = [1, 1, 1]} : vector<8x10x8xf32> to vector<8x8x8xf32>
    %123 = vector.shape_cast %122 : vector<8x8x8xf32> to vector<64x8xf32>
    %124 = arith.truncf %123 : vector<64x8xf32> to vector<64x8xbf16>
    %c0_51 = arith.constant 0 : index
    %c0_52 = arith.constant 0 : index
    %125 = vector.load %arg9[%c0_51, %c0_52] : memref<64x288xbf16, #tpu.memory_space<vmem>>, vector<64x8xbf16>
    tpu.vector_store %arg9[%c0_51, %c0_52], %124 {strides = array<i32>} : memref<64x288xbf16, #tpu.memory_space<vmem>>, vector<64x8xbf16>,
    %126 = vector.extract_strided_slice %121 {offsets = [0, 1, 0], sizes = [8, 8, 8], strides = [1, 1, 1]} : vector<8x10x8xf32> to vector<8x8x8xf32>
    %127 = vector.shape_cast %126 : vector<8x8x8xf32> to vector<64x8xf32>
    %128 = arith.truncf %127 : vector<64x8xf32> to vector<64x8xbf16>
    %c0_53 = arith.constant 0 : index
    %c8 = arith.constant 8 : index
    %129 = vector.load %arg9[%c0_53, %c8] : memref<64x288xbf16, #tpu.memory_space<vmem>>, vector<64x8xbf16>
    tpu.vector_store %arg9[%c0_53, %c8], %128 {strides = array<i32>} : memref<64x288xbf16, #tpu.memory_space<vmem>>, vector<64x8xbf16>,
    %130 = vector.extract_strided_slice %121 {offsets = [0, 2, 0], sizes = [8, 8, 8], strides = [1, 1, 1]} : vector<8x10x8xf32> to vector<8x8x8xf32>
    %131 = vector.shape_cast %130 : vector<8x8x8xf32> to vector<64x8xf32>
    %132 = arith.truncf %131 : vector<64x8xf32> to vector<64x8xbf16>
    %c0_54 = arith.constant 0 : index
    %c16 = arith.constant 16 : index
    %133 = vector.load %arg9[%c0_54, %c16] : memref<64x288xbf16, #tpu.memory_space<vmem>>, vector<64x8xbf16>
    tpu.vector_store %arg9[%c0_54, %c16], %132 {strides = array<i32>} : memref<64x288xbf16, #tpu.memory_space<vmem>>, vector<64x8xbf16>,
    %134 = vector.extract_strided_slice %118 {offsets = [1, 0, 0], sizes = [8, 10, 8], strides = [1, 1, 1]} : vector<10x10x8xf32> to vector<8x10x8xf32>
    %135 = vector.extract_strided_slice %134 {offsets = [0, 0, 0], sizes = [8, 8, 8], strides = [1, 1, 1]} : vector<8x10x8xf32> to vector<8x8x8xf32>
    %136 = vector.shape_cast %135 : vector<8x8x8xf32> to vector<64x8xf32>
    %137 = arith.truncf %136 : vector<64x8xf32> to vector<64x8xbf16>
    %c0_55 = arith.constant 0 : index
    %c24 = arith.constant 24 : index
    %138 = vector.load %arg9[%c0_55, %c24] : memref<64x288xbf16, #tpu.memory_space<vmem>>, vector<64x8xbf16>
    tpu.vector_store %arg9[%c0_55, %c24], %137 {strides = array<i32>} : memref<64x288xbf16, #tpu.memory_space<vmem>>, vector<64x8xbf16>,
    %139 = vector.extract_strided_slice %134 {offsets = [0, 1, 0], sizes = [8, 8, 8], strides = [1, 1, 1]} : vector<8x10x8xf32> to vector<8x8x8xf32>
    %140 = vector.shape_cast %139 : vector<8x8x8xf32> to vector<64x8xf32>
    %141 = arith.truncf %140 : vector<64x8xf32> to vector<64x8xbf16>
    %c0_56 = arith.constant 0 : index
    %c32_57 = arith.constant 32 : index
    %142 = vector.load %arg9[%c0_56, %c32_57] : memref<64x288xbf16, #tpu.memory_space<vmem>>, vector<64x8xbf16>
    tpu.vector_store %arg9[%c0_56, %c32_57], %141 {strides = array<i32>} : memref<64x288xbf16, #tpu.memory_space<vmem>>, vector<64x8xbf16>,
    %143 = vector.extract_strided_slice %134 {offsets = [0, 2, 0], sizes = [8, 8, 8], strides = [1, 1, 1]} : vector<8x10x8xf32> to vector<8x8x8xf32>
    %144 = vector.shape_cast %143 : vector<8x8x8xf32> to vector<64x8xf32>
    %145 = arith.truncf %144 : vector<64x8xf32> to vector<64x8xbf16>
    %c0_58 = arith.constant 0 : index
    %c40 = arith.constant 40 : index
    %146 = vector.load %arg9[%c0_58, %c40] : memref<64x288xbf16, #tpu.memory_space<vmem>>, vector<64x8xbf16>
    tpu.vector_store %arg9[%c0_58, %c40], %145 {strides = array<i32>} : memref<64x288xbf16, #tpu.memory_space<vmem>>, vector<64x8xbf16>,
    %147 = vector.extract_strided_slice %118 {offsets = [2, 0, 0], sizes = [8, 10, 8], strides = [1, 1, 1]} : vector<10x10x8xf32> to vector<8x10x8xf32>
    %148 = vector.extract_strided_slice %147 {offsets = [0, 0, 0], sizes = [8, 8, 8], strides = [1, 1, 1]} : vector<8x10x8xf32> to vector<8x8x8xf32>
    %149 = vector.shape_cast %148 : vector<8x8x8xf32> to vector<64x8xf32>
    %150 = arith.truncf %149 : vector<64x8xf32> to vector<64x8xbf16>
    %c0_59 = arith.constant 0 : index
    %c48 = arith.constant 48 : index
    %151 = vector.load %arg9[%c0_59, %c48] : memref<64x288xbf16, #tpu.memory_space<vmem>>, vector<64x8xbf16>
    tpu.vector_store %arg9[%c0_59, %c48], %150 {strides = array<i32>} : memref<64x288xbf16, #tpu.memory_space<vmem>>, vector<64x8xbf16>,
    %152 = vector.extract_strided_slice %147 {offsets = [0, 1, 0], sizes = [8, 8, 8], strides = [1, 1, 1]} : vector<8x10x8xf32> to vector<8x8x8xf32>
    %153 = vector.shape_cast %152 : vector<8x8x8xf32> to vector<64x8xf32>
    %154 = arith.truncf %153 : vector<64x8xf32> to vector<64x8xbf16>
    %c0_60 = arith.constant 0 : index
    %c56 = arith.constant 56 : index
    %155 = vector.load %arg9[%c0_60, %c56] : memref<64x288xbf16, #tpu.memory_space<vmem>>, vector<64x8xbf16>
    tpu.vector_store %arg9[%c0_60, %c56], %154 {strides = array<i32>} : memref<64x288xbf16, #tpu.memory_space<vmem>>, vector<64x8xbf16>,
    %156 = vector.extract_strided_slice %147 {offsets = [0, 2, 0], sizes = [8, 8, 8], strides = [1, 1, 1]} : vector<8x10x8xf32> to vector<8x8x8xf32>
    %157 = vector.shape_cast %156 : vector<8x8x8xf32> to vector<64x8xf32>
    %158 = arith.truncf %157 : vector<64x8xf32> to vector<64x8xbf16>
    %c0_61 = arith.constant 0 : index
    %c64_62 = arith.constant 64 : index
    %159 = vector.load %arg9[%c0_61, %c64_62] : memref<64x288xbf16, #tpu.memory_space<vmem>>, vector<64x8xbf16>
    tpu.vector_store %arg9[%c0_61, %c64_62], %158 {strides = array<i32>} : memref<64x288xbf16, #tpu.memory_space<vmem>>, vector<64x8xbf16>,
    %c0_63 = arith.constant 0 : index
    %c0_64 = arith.constant 0 : index
    %160 = vector.load %arg9[%c0_63, %c0_64] : memref<64x288xbf16, #tpu.memory_space<vmem>>, vector<64x72xbf16>
    %cst_65 = arith.constant dense<0.000000e+00> : vector<64x32xf32>
    %161 = tpu.matmul %160, %119, %cst_65 {dimension_numbers = #tpu.dot_dimension_numbers<[1], [0], [0], [1], [0, 0, 1, 1], [], []>} : vector<64x72xbf16>, vector<72x32xbf16>, vector<64x32xf32> -> vector<64x32xf32>
    %162 = vector.broadcast %120 : vector<1x32xf32> to vector<64x32xf32>
    %163 = arith.addf %161, %162 : vector<64x32xf32>
    %164 = arith.negf %163 : vector<64x32xf32>
    %165 = math.exp %164 : vector<64x32xf32>
    %cst_66 = arith.constant 1.000000e+00 : f32
    %166 = vector.broadcast %cst_66 : f32 to vector<64x32xf32>
    %167 = arith.addf %166, %165 : vector<64x32xf32>
    %168 = arith.divf %166, %167 : vector<64x32xf32>
    %169 = arith.mulf %168, %57 : vector<64x32xf32>
    %170 = vector.shape_cast %1 : vector<8x8x32xf32> to vector<64x32xf32>
    %171 = arith.addf %169, %170 : vector<64x32xf32>
    %c0_67 = arith.constant 0 : index
    %c0_68 = arith.constant 0 : index
    %c0_69 = arith.constant 0 : index
    %172 = vector.load %arg8[%c0_67, %c0_68, %c0_69] : memref<1x64x32xf32, #tpu.memory_space<vmem>>, vector<1x64x32xf32>
    %173 = vector.shape_cast %172 : vector<1x64x32xf32> to vector<64x32xf32>
    %174 = vector.shape_cast %171 : vector<64x32xf32> to vector<1x64x32xf32>
    tpu.vector_store %arg8[%c0_67, %c0_68, %c0_69], %174 {strides = array<i32>} : memref<1x64x32xf32, #tpu.memory_space<vmem>>, vector<1x64x32xf32>,
    return
  }
  func.func @transform_0(%arg0: i32) -> (i32, i32, i32, i32) {
    %c0_i32 = arith.constant 0 : i32
    %c0_i32_0 = arith.constant 0 : i32
    %c0_i32_1 = arith.constant 0 : i32
    %c0_i32_2 = arith.constant 0 : i32
    return %arg0, %c0_i32, %c0_i32_0, %c0_i32_1 : i32, i32, i32, i32
  }
  func.func @transform_1(%arg0: i32) -> (i32, i32) {
    %c0_i32 = arith.constant 0 : i32
    %c0_i32_0 = arith.constant 0 : i32
    %c0_i32_1 = arith.constant 0 : i32
    return %c0_i32, %c0_i32_0 : i32, i32
  }
  func.func @transform_2(%arg0: i32) -> (i32, i32) {
    %c0_i32 = arith.constant 0 : i32
    %c0_i32_0 = arith.constant 0 : i32
    %c0_i32_1 = arith.constant 0 : i32
    return %c0_i32, %c0_i32_0 : i32, i32
  }
  func.func @transform_3(%arg0: i32) -> (i32, i32) {
    %c0_i32 = arith.constant 0 : i32
    %c0_i32_0 = arith.constant 0 : i32
    %c0_i32_1 = arith.constant 0 : i32
    return %c0_i32, %c0_i32_0 : i32, i32
  }
  func.func @transform_4(%arg0: i32) -> (i32, i32) {
    %c0_i32 = arith.constant 0 : i32
    %c0_i32_0 = arith.constant 0 : i32
    %c0_i32_1 = arith.constant 0 : i32
    return %c0_i32, %c0_i32_0 : i32, i32
  }
  func.func @transform_5(%arg0: i32) -> (i32, i32) {
    %c0_i32 = arith.constant 0 : i32
    %c0_i32_0 = arith.constant 0 : i32
    %c0_i32_1 = arith.constant 0 : i32
    return %c0_i32, %c0_i32_0 : i32, i32
  }
  func.func @transform_6(%arg0: i32) -> (i32, i32) {
    %c0_i32 = arith.constant 0 : i32
    %c0_i32_0 = arith.constant 0 : i32
    %c0_i32_1 = arith.constant 0 : i32
    return %c0_i32, %c0_i32_0 : i32, i32
  }
  func.func @transform_7(%arg0: i32) -> (i32, i32, i32) {
    %c0_i32 = arith.constant 0 : i32
    %c0_i32_0 = arith.constant 0 : i32
    %c0_i32_1 = arith.constant 0 : i32
    return %arg0, %c0_i32, %c0_i32_0 : i32, i32, i32
  }
}

</mosaic_0001>

<llo_original>
// kernel: sgblock_forward.1
$region0: #{sgblock_forward.1}
  #allocation0 [shape = 'u32[]', space=smem, size = 0x4, offset = 0x4, fixed_abs, tag = 'smem constant byte address 0x4 - core index']
  #allocation1 [shape = 'u32[72,128]{1,0:T(1,128)}', space=vmem, size = 0x9000, scoped, tag = 'internal scratch']
  #allocation2 [shape = 'bf16[64,288]{1,0:T(8,128)(2,1)}', space=vmem, size = 0xc000, scoped, tag = 'scratch operand']
  %s0 = inlined_call_operand.vmem [shape: f32[2,8,8,32], index: 0, kind: input, shape index: {}]
  %s1 = inlined_call_operand.vmem [shape: bf16[288,32], index: 1, kind: input, shape index: {}]
  %s2 = inlined_call_operand.vmem [shape: f32[1,32], index: 2, kind: input, shape index: {}]
  %s3 = inlined_call_operand.vmem [shape: bf16[288,8], index: 3, kind: input, shape index: {}]
  %s4 = inlined_call_operand.vmem [shape: f32[1,8], index: 4, kind: input, shape index: {}]
  %s5 = inlined_call_operand.vmem [shape: bf16[72,32], index: 5, kind: input, shape index: {}]
  %s6 = inlined_call_operand.vmem [shape: f32[1,32], index: 6, kind: input, shape index: {}]
  %s7 = inlined_call_operand.hbm [shape: f32[2,64,32], index: 7, kind: output, shape index: {}]
  %s8 = sld [smem:[#allocation0]]
  $region61: #{sgblock_forward.1} parent=0
    _
  %s10 = ssub.s32 1, %s8
  %s11 = scalar_select 0, %s10, %s8
  $region1: #{sgblock_forward.1} parent=0
    #allocation3 [shape = 'u8[65536]{0}', space=vmem, size = 0x10000, scoped, tag = 'output window, operand 0']
    #allocation4 [shape = 's32[2]{0}', space=sflag, size = 0x8, scoped, tag = 'scoped memory for sgblock_forward.1']
    %12 = vsyncpa [#allocation4], 0
    %s13 = scalar_lea.sflag [#allocation4], 1
    %14 = vsyncpa %s13, 0
    loop: start=0, step=1, limit=4
    $region2: #{sgblock_forward.1} parent=1 // loop_pre_header
      _
    $region3: #{sgblock_forward.1} parent=1 // loop_header
      %s16 = sphi 0, %s20
      %p17 = scmp.ge.s32.totalorder %s16, 4
      %s26 = sphi 0, %s28
      %s29 = sphi 0, %s26
      %s30 = sphi 0, %s29
      %s46 = sphi 0, %s30
      %s50 = sphi 0, %s50
      %s52 = sphi 0, %s50
      %s53 = sphi 0, %s52
      %s67 = sphi 0, %s53
      %s71 = sphi 0, %s71
      %s73 = sphi 0, %s71
      %s74 = sphi 0, %s73
      %s88 = sphi 0, %s74
      %s92 = sphi 0, %s92
      %s94 = sphi 0, %s92
      %s95 = sphi 0, %s94
      %s109 = sphi 0, %s95
      %s113 = sphi 0, %s113
      %s115 = sphi 0, %s113
      %s116 = sphi 0, %s115
      %s130 = sphi 0, %s116
      %s134 = sphi 0, %s134
      %s136 = sphi 0, %s134
      %s137 = sphi 0, %s136
      %s151 = sphi 0, %s137
      %s155 = sphi 0, %s155
      %s157 = sphi 0, %s155
      %s158 = sphi 0, %s157
      %s172 = sphi 0, %s158
      %s178 = sphi 0, %s180
      %s181 = sphi 0, %s178
      %s182 = sphi 0, %s181
      %s198 = sphi 0, %s182
    $region4: #{sgblock_forward.1} parent=1 // loop_header_branch
      %19 = sbr.rel (%p17) target = $region8
    $region5: #{sgblock_forward.1} parent=1 // loop_body
      %s21 = ssub.s32 %s16, 1
      %s22 = ssub.s32 %s16, 2
      %s23 = sadd.s32 %s16, 1
      %s24 = ssub.s32 %s16, %s23
      %p25 = scmp.eq.s32.totalorder %s24, 0
      %s27 = sadd.s32 %s26, 1
      %s28 = scalar_select %p25, %s26, %s27
      %p31 = pneg %p25
      %p32 = scmp.eq.s32.totalorder %s16, 1
      %p33 = por %p31, %p32
      %p34 = scmp.ne.s32.totalorder %s26, %s29
      %p35 = scmp.eq.s32.totalorder %s16, 0
      %p36 = por %p34, %p35
      %p37 = scmp.ne.s32.totalorder %s26, %s29
      %p38 = scmp.eq.s32.totalorder %s21, 1
      %p39 = por %p37, %p38
      %p40 = scmp.ne.s32.totalorder %s29, %s30
      %p41 = scmp.eq.s32.totalorder %s21, 0
      %p42 = por %p40, %p41
      %p43 = scmp.ne.s32.totalorder %s29, %s30
      %p44 = scmp.eq.s32.totalorder %s22, 1
      %p45 = por %p43, %p44
      %p47 = scmp.ne.s32.totalorder %s30, %s46
      %p48 = scmp.eq.s32.totalorder %s22, 0
      %p49 = por %p47, %p48
      %s51 = sadd.s32 %s50, 1
      %p54 = scmp.eq.s32.totalorder %s16, 1
      %p55 = scmp.ne.s32.totalorder %s50, %s52
      %p56 = scmp.eq.s32.totalorder %s16, 0
      %p57 = por %p55, %p56
      %p58 = scmp.ne.s32.totalorder %s50, %s52
      %p59 = scmp.eq.s32.totalorder %s21, 1
      %p60 = por %p58, %p59
      %p61 = scmp.ne.s32.totalorder %s52, %s53
      %p62 = scmp.eq.s32.totalorder %s21, 0
      %p63 = por %p61, %p62
      %p64 = scmp.ne.s32.totalorder %s52, %s53
      %p65 = scmp.eq.s32.totalorder %s22, 1
      %p66 = por %p64, %p65
      %p68 = scmp.ne.s32.totalorder %s53, %s67
      %p69 = scmp.eq.s32.totalorder %s22, 0
      %p70 = por %p68, %p69
      %s72 = sadd.s32 %s71, 1
      %p75 = scmp.eq.s32.totalorder %s16, 1
      %p76 = scmp.ne.s32.totalorder %s71, %s73
      %p77 = scmp.eq.s32.totalorder %s16, 0
      %p78 = por %p76, %p77
      %p79 = scmp.ne.s32.totalorder %s71, %s73
      %p80 = scmp.eq.s32.totalorder %s21, 1
      %p81 = por %p79, %p80
      %p82 = scmp.ne.s32.totalorder %s73, %s74
      %p83 = scmp.eq.s32.totalorder %s21, 0
      %p84 = por %p82, %p83
      %p85 = scmp.ne.s32.totalorder %s73, %s74
      %p86 = scmp.eq.s32.totalorder %s22, 1
      %p87 = por %p85, %p86
      %p89 = scmp.ne.s32.totalorder %s74, %s88
      %p90 = scmp.eq.s32.totalorder %s22, 0
      %p91 = por %p89, %p90
      %s93 = sadd.s32 %s92, 1
      %p96 = scmp.eq.s32.totalorder %s16, 1
      %p97 = scmp.ne.s32.totalorder %s92, %s94
      %p98 = scmp.eq.s32.totalorder %s16, 0
      %p99 = por %p97, %p98
      %p100 = scmp.ne.s32.totalorder %s92, %s94
      %p101 = scmp.eq.s32.totalorder %s21, 1
      %p102 = por %p100, %p101
      %p103 = scmp.ne.s32.totalorder %s94, %s95
      %p104 = scmp.eq.s32.totalorder %s21, 0
      %p105 = por %p103, %p104
      %p106 = scmp.ne.s32.totalorder %s94, %s95
      %p107 = scmp.eq.s32.totalorder %s22, 1
      %p108 = por %p106, %p107
      %p110 = scmp.ne.s32.totalorder %s95, %s109
      %p111 = scmp.eq.s32.totalorder %s22, 0
      %p112 = por %p110, %p111
      %s114 = sadd.s32 %s113, 1
      %p117 = scmp.eq.s32.totalorder %s16, 1
      %p118 = scmp.ne.s32.totalorder %s113, %s115
      %p119 = scmp.eq.s32.totalorder %s16, 0
      %p120 = por %p118, %p119
      %p121 = scmp.ne.s32.totalorder %s113, %s115
      %p122 = scmp.eq.s32.totalorder %s21, 1
      %p123 = por %p121, %p122
      %p124 = scmp.ne.s32.totalorder %s115, %s116
      %p125 = scmp.eq.s32.totalorder %s21, 0
      %p126 = por %p124, %p125
      %p127 = scmp.ne.s32.totalorder %s115, %s116
      %p128 = scmp.eq.s32.totalorder %s22, 1
      %p129 = por %p127, %p128
      %p131 = scmp.ne.s32.totalorder %s116, %s130
      %p132 = scmp.eq.s32.totalorder %s22, 0
      %p133 = por %p131, %p132
      %s135 = sadd.s32 %s134, 1
      %p138 = scmp.eq.s32.totalorder %s16, 1
      %p139 = scmp.ne.s32.totalorder %s134, %s136
      %p140 = scmp.eq.s32.totalorder %s16, 0
      %p141 = por %p139, %p140
      %p142 = scmp.ne.s32.totalorder %s134, %s136
      %p143 = scmp.eq.s32.totalorder %s21, 1
      %p144 = por %p142, %p143
      %p145 = scmp.ne.s32.totalorder %s136, %s137
      %p146 = scmp.eq.s32.totalorder %s21, 0
      %p147 = por %p145, %p146
      %p148 = scmp.ne.s32.totalorder %s136, %s137
      %p149 = scmp.eq.s32.totalorder %s22, 1
      %p150 = por %p148, %p149
      %p152 = scmp.ne.s32.totalorder %s137, %s151
      %p153 = scmp.eq.s32.totalorder %s22, 0
      %p154 = por %p152, %p153
      %s156 = sadd.s32 %s155, 1
      %p159 = scmp.eq.s32.totalorder %s16, 1
      %p160 = scmp.ne.s32.totalorder %s155, %s157
      %p161 = scmp.eq.s32.totalorder %s16, 0
      %p162 = por %p160, %p161
      %p163 = scmp.ne.s32.totalorder %s155, %s157
      %p164 = scmp.eq.s32.totalorder %s21, 1
      %p165 = por %p163, %p164
      %p166 = scmp.ne.s32.totalorder %s157, %s158
      %p167 = scmp.eq.s32.totalorder %s21, 0
      %p168 = por %p166, %p167
      %p169 = scmp.ne.s32.totalorder %s157, %s158
      %p170 = scmp.eq.s32.totalorder %s22, 1
      %p171 = por %p169, %p170
      %p173 = scmp.ne.s32.totalorder %s158, %s172
      %p174 = scmp.eq.s32.totalorder %s22, 0
      %p175 = por %p173, %p174
      %s176 = ssub.s32 %s16, %s23
      %p177 = scmp.eq.s32.totalorder %s176, 0
      %s179 = sadd.s32 %s178, 1
      %s180 = scalar_select %p177, %s178, %s179
      %p183 = pneg %p177
      %p184 = scmp.eq.s32.totalorder %s16, 1
      %p185 = por %p183, %p184
      %p186 = scmp.ne.s32.totalorder %s178, %s181
      %p187 = scmp.eq.s32.totalorder %s16, 0
      %p188 = por %p186, %p187
      %p189 = scmp.ne.s32.totalorder %s178, %s181
      %p190 = scmp.eq.s32.totalorder %s21, 1
      %p191 = por %p189, %p190
      %p192 = scmp.ne.s32.totalorder %s181, %s182
      %p193 = scmp.eq.s32.totalorder %s21, 0
      %p194 = por %p192, %p193
      %p195 = scmp.ne.s32.totalorder %s181, %s182
      %p196 = scmp.eq.s32.totalorder %s22, 1
      %p197 = por %p195, %p196
      %p199 = scmp.ne.s32.totalorder %s182, %s198
      %p200 = scmp.eq.s32.totalorder %s22, 0
      %p201 = por %p199, %p200
      %p202 = scmp.le.s32.totalorder 1, %s16
      %p203 = scmp.lt.s32.totalorder %s16, 3
      %p204 = pnand %p202, %p203
      %p205 = pneg %p204
      // Predicated region
      $region9: #{sgblock_forward.1} parent=5 // pred_check
        _
      $region10: #{sgblock_forward.1} parent=5 // pred_check_branch
        %207 = sbr.rel (%p204) target = $region12
      $region11: #{sgblock_forward.1} parent=5 // pred_region
        %s208 = ssub.s32 %s16, 1
        // Predicated region
        $region13: #{sgblock_forward.1} parent=11 // pred_check
          %p209 = pneg %p63
        $region14: #{sgblock_forward.1} parent=11 // pred_check_branch
          %211 = sbr.rel (%p209) target = $region16
        $region15: #{sgblock_forward.1} parent=11 // pred_region
          _
        $region16: #{sgblock_forward.1} parent=11 // pred_fallthru
          _
        // Predicated region
        $region17: #{sgblock_forward.1} parent=11 // pred_check
          %p212 = pneg %p84
        $region18: #{sgblock_forward.1} parent=11 // pred_check_branch
          %214 = sbr.rel (%p212) target = $region20
        $region19: #{sgblock_forward.1} parent=11 // pred_region
          _
        $region20: #{sgblock_forward.1} parent=11 // pred_fallthru
          _
        // Predicated region
        $region21: #{sgblock_forward.1} parent=11 // pred_check
          %p215 = pneg %p105
        $region22: #{sgblock_forward.1} parent=11 // pred_check_branch
          %217 = sbr.rel (%p215) target = $region24
        $region23: #{sgblock_forward.1} parent=11 // pred_region
          _
        $region24: #{sgblock_forward.1} parent=11 // pred_fallthru
          _
        // Predicated region
        $region25: #{sgblock_forward.1} parent=11 // pred_check
          %p218 = pneg %p126
        $region26: #{sgblock_forward.1} parent=11 // pred_check_branch
          %220 = sbr.rel (%p218) target = $region28
        $region27: #{sgblock_forward.1} parent=11 // pred_region
          _
        $region28: #{sgblock_forward.1} parent=11 // pred_fallthru
          _
        // Predicated region
        $region29: #{sgblock_forward.1} parent=11 // pred_check
          %p221 = pneg %p147
        $region30: #{sgblock_forward.1} parent=11 // pred_check_branch
          %223 = sbr.rel (%p221) target = $region32
        $region31: #{sgblock_forward.1} parent=11 // pred_region
          _
        $region32: #{sgblock_forward.1} parent=11 // pred_fallthru
          _
        // Predicated region
        $region33: #{sgblock_forward.1} parent=11 // pred_check
          %p224 = pneg %p168
        $region34: #{sgblock_forward.1} parent=11 // pred_check_branch
          %226 = sbr.rel (%p224) target = $region36
        $region35: #{sgblock_forward.1} parent=11 // pred_region
          _
        $region36: #{sgblock_forward.1} parent=11 // pred_fallthru
          _
      $region12: #{sgblock_forward.1} parent=5 // pred_fallthru
        _
      %p227 = scmp.lt.s32.totalorder %s16, 2
      // Predicated region
      $region37: #{sgblock_forward.1} parent=5 // pred_check
        %p228 = pneg %p227
      $region38: #{sgblock_forward.1} parent=5 // pred_check_branch
        %230 = sbr.rel (%p228) target = $region40
      $region39: #{sgblock_forward.1} parent=5 // pred_region
        // Predicated region
        $region41: #{sgblock_forward.1} parent=39 // pred_check
          %p231 = pneg %p36
        $region42: #{sgblock_forward.1} parent=39 // pred_check_branch
          %233 = sbr.rel (%p231) target = $region44
        $region43: #{sgblock_forward.1} parent=39 // pred_region
          %p234 = scmp.lt.s32.totalorder %s16, 1
          %s235 = scalar_select %p234, %s16, 1
          %s236 = smul.addr %s235, 8
          %s237 = smul.addr %s236, 8
          %s238 = scalar_lea.vmem %s0, %s237
        $region44: #{sgblock_forward.1} parent=39 // pred_fallthru
          _
      $region40: #{sgblock_forward.1} parent=5 // pred_fallthru
        _
      %p239 = scmp.le.s32.totalorder 1, %s16
      %p240 = scmp.lt.s32.totalorder %s16, 3
      %p241 = pnand %p239, %p240
      %p242 = pneg %p241
      // Predicated region
      $region45: #{sgblock_forward.1} parent=5 // pred_check
        _
      $region46: #{sgblock_forward.1} parent=5 // pred_check_branch
        %244 = sbr.rel (%p241) target = $region48
      $region47: #{sgblock_forward.1} parent=5 // pred_region
        %s245 = ssub.s32 %s16, 1
        %p246 = scmp.lt.s32.totalorder %s21, 1
        %s247 = scalar_select %p246, %s21, 1
        %s248 = smul.addr %s247, 8
        %s249 = smul.addr %s248, 8
        %s250 = scalar_lea.vmem %s0, %s249
        %p251 = pneg %p42
        %p252 = pneg %p39
        %p253 = pneg %p63
        %p254 = pneg %p60
        %p255 = pneg %p84
        %p256 = pneg %p81
        %p257 = pneg %p105
        %p258 = pneg %p102
        %p259 = pneg %p126
        %p260 = pneg %p123
        %p261 = pneg %p147
        %p262 = pneg %p144
        %p263 = pneg %p168
        %p264 = pneg %p165
        %p265 = pneg %p194
        %p266 = pneg %p191
        %s267 = sand.u32 %s181, 1
        %s268 = scalar_lea.sflag [#allocation4], %s267
        %s269 = sand.u32 %s181, 1
        %s270 = smul.addr %s269, 64
        %s271 = scalar_lea.vmem [#allocation3], %s270
        %p272 = scmp.lt.s32.totalorder %s21, 1
        %s273 = scalar_select %p272, %s21, 1
        %s274 = smul.addr %s273, 8
        %s275 = smul.addr %s274, 8
        %s276 = scalar_lea.vmem %s0, %s275
        %v278 = vld [vmem:[%s276] sm:$0xff]
        %v279 = vld [vmem:[%s276 + $0x8] sm:$0xff]
        %v280 = vld [vmem:[%s276 + $0x10] sm:$0xff]
        %v281 = vld [vmem:[%s276 + $0x18] sm:$0xff]
        %v282 = vld [vmem:[%s276 + $0x20] sm:$0xff]
        %v283 = vld [vmem:[%s276 + $0x28] sm:$0xff]
        %v284 = vld [vmem:[%s276 + $0x30] sm:$0xff]
        %v285 = vld [vmem:[%s276 + $0x38] sm:$0xff]
        %vm286 = vcmp.ge.f32.partialorder %v278, 0.0
        %vm287 = vcmp.ge.f32.partialorder %v279, 0.0
        %vm288 = vcmp.ge.f32.partialorder %v280, 0.0
        %vm289 = vcmp.ge.f32.partialorder %v281, 0.0
        %vm290 = vcmp.ge.f32.partialorder %v282, 0.0
        %vm291 = vcmp.ge.f32.partialorder %v283, 0.0
        %vm292 = vcmp.ge.f32.partialorder %v284, 0.0
        %vm293 = vcmp.ge.f32.partialorder %v285, 0.0
        %v294 = vmul.f32 %v278, 0.2
        %v295 = vmul.f32 %v279, 0.2
        %v296 = vmul.f32 %v280, 0.2
        %v297 = vmul.f32 %v281, 0.2
        %v298 = vmul.f32 %v282, 0.2
        %v299 = vmul.f32 %v283, 0.2
        %v300 = vmul.f32 %v284, 0.2
        %v301 = vmul.f32 %v285, 0.2
        %v302 = vsel %vm286, %v278, %v294
        %v303 = vsel %vm287, %v279, %v295
        %v304 = vsel %vm288, %v280, %v296
        %v305 = vsel %vm289, %v281, %v297
        %v306 = vsel %vm290, %v282, %v298
        %v307 = vsel %vm291, %v283, %v299
        %v308 = vsel %vm292, %v284, %v300
        %v309 = vsel %vm293, %v285, %v301
        %v318 = vrot.slane %v303, 1
        %v319 = vrot.slane %v302, 1
        %v320 = vrot.slane %v304, 1
        %v321 = vrot.slane %v305, 1
        %v322 = vrot.slane %v306, 1
        %v323 = vrot.slane %v307, 1
        %v324 = vrot.slane %v308, 1
        %v325 = vrot.slane %v309, 1
        %v334 = vrot.slane %v303, 7
        %v335 = vrot.slane %v302, 7
        %v336 = vrot.slane %v304, 7
        %v337 = vrot.slane %v305, 7
        %v338 = vrot.slane %v306, 7
        %v339 = vrot.slane %v307, 7
        %v340 = vrot.slane %v308, 7
        %v341 = vrot.slane %v309, 7
        %v350 = vrot.slane %v303, 5
        %v351 = vrot.slane %v302, 5
        %v352 = vrot.slane %v304, 5
        %v353 = vrot.slane %v305, 5
        %v354 = vrot.slane %v306, 5
        %v355 = vrot.slane %v307, 5
        %v356 = vrot.slane %v308, 5
        %v357 = vrot.slane %v309, 5
        %vm366 = vcmask 1040384
        %v367 = vsel %vm366, %v318, %v334
        %v368 = vsel %vm366, %v319, %v335
        %v369 = vsel %vm366, %v320, %v336
        %v370 = vsel %vm366, %v321, %v337
        %v371 = vsel %vm366, %v322, %v338
        %v372 = vsel %vm366, %v323, %v339
        %v373 = vsel %vm366, %v324, %v340
        %v374 = vsel %vm366, %v325, %v341
        %v375 = vsel %vm366, %v334, %v350
        %v376 = vsel %vm366, %v335, %v351
        %v377 = vsel %vm366, %v336, %v352
        %v378 = vsel %vm366, %v337, %v353
        %v379 = vsel %vm366, %v338, %v354
        %v380 = vsel %vm366, %v339, %v355
        %v381 = vsel %vm366, %v340, %v356
        %v382 = vsel %vm366, %v341, %v357
        %v383 = vld [vmem:[%s1] sm:$0xf]
        %v384 = vld [vmem:[%s1 + $0x4] sm:$0xf]
        %v385 = vld [vmem:[%s1 + $0x8] sm:$0xf]
        %v386 = vld [vmem:[%s1 + $0xc] sm:$0xf]
        %v387 = vld [vmem:[%s1 + $0x10] sm:$0xf]
        %v388 = vld [vmem:[%s1 + $0x14] sm:$0xf]
        %v389 = vld [vmem:[%s1 + $0x18] sm:$0xf]
        %v390 = vld [vmem:[%s1 + $0x1c] sm:$0xf]
        %v391 = vld [vmem:[%s1 + $0x20] sm:$0xf]
        %v392 = vld [vmem:[%s1 + $0x24] sm:$0xf]
        %v393 = vld [vmem:[%s1 + $0x28] sm:$0xf]
        %v394 = vld [vmem:[%s1 + $0x2c] sm:$0xf]
        %v395 = vld [vmem:[%s1 + $0x30] sm:$0xf]
        %v396 = vld [vmem:[%s1 + $0x34] sm:$0xf]
        %v397 = vld [vmem:[%s1 + $0x38] sm:$0xf]
        %v398 = vld [vmem:[%s1 + $0x3c] sm:$0xf]
        %v399 = vld [vmem:[%s1 + $0x40] sm:$0xf]
        %v400 = vld [vmem:[%s1 + $0x44] sm:$0xf]
        %v401 = vld [vmem:[%s1 + $0x48] sm:$0xf]
        %v402 = vld [vmem:[%s1 + $0x4c] sm:$0xf]
        %v403 = vld [vmem:[%s1 + $0x50] sm:$0xf]
        %v404 = vld [vmem:[%s1 + $0x54] sm:$0xf]
        %v405 = vld [vmem:[%s1 + $0x58] sm:$0xf]
        %v406 = vld [vmem:[%s1 + $0x5c] sm:$0xf]
        %v407 = vld [vmem:[%s1 + $0x60] sm:$0xf]
        %v408 = vld [vmem:[%s1 + $0x64] sm:$0xf]
        %v409 = vld [vmem:[%s1 + $0x68] sm:$0xf]
        %v410 = vld [vmem:[%s1 + $0x6c] sm:$0xf]
        %v411 = vld [vmem:[%s1 + $0x70] sm:$0xf]
        %v412 = vld [vmem:[%s1 + $0x74] sm:$0xf]
        %v413 = vld [vmem:[%s1 + $0x78] sm:$0xf]
        %v414 = vld [vmem:[%s1 + $0x7c] sm:$0xf]
        %v415 = vld [vmem:[%s1 + $0x80] sm:$0xf]
        %v416 = vld [vmem:[%s1 + $0x84] sm:$0xf]
        %v417 = vld [vmem:[%s1 + $0x88] sm:$0xf]
        %v418 = vld [vmem:[%s1 + $0x8c] sm:$0xf]
        %v419 = vld [vmem:[%s2] sm:$0x1]
        %v420 = vpack.c.bf16 %v367, %v367
        %v421 = vpack.c.bf16 %v368, %v368
        %v422 = vpack.c.bf16 %v369, %v369
        %v423 = vpack.c.bf16 %v370, %v370
        %v424 = vpack.c.bf16 %v371, %v371
        %v425 = vpack.c.bf16 %v372, %v372
        %v426 = vpack.c.bf16 %v373, %v373
        %vm427 = vcmask 257024
        %428 = vst.msk [vmem:[#allocation2] sm:$0xf] %vm427, %v420
        %429 = vst.msk [vmem:[#allocation2 + $0xc] sm:$0xf] %vm427, %v421
        %430 = vst.msk [vmem:[#allocation2 + $0x18] sm:$0xf] %vm427, %v420
        %431 = vst.msk [vmem:[#allocation2 + $0x24] sm:$0xf] %vm427, %v422
        %432 = vst.msk [vmem:[#allocation2 + $0x30] sm:$0xf] %vm427, %v423
        %433 = vst.msk [vmem:[#allocation2 + $0x3c] sm:$0xf] %vm427, %v424
        %434 = vst.msk [vmem:[#allocation2 + $0x48] sm:$0xf] %vm427, %v425
        %435 = vst.msk [vmem:[#allocation2 + $0x54] sm:$0xf] %vm427, %v426
        %vm450 = vcmask 1046528
        %v451 = vrot.slane %v367, 1
        %v452 = vrot.slane %v375, 1
        %v453 = vsel %vm450, %v451, %v452
        %v454 = vrot.slane %v368, 1
        %v455 = vrot.slane %v376, 1
        %v456 = vsel %vm450, %v454, %v455
        %v457 = vrot.slane %v369, 1
        %v458 = vrot.slane %v377, 1
        %v459 = vsel %vm450, %v457, %v458
        %v460 = vrot.slane %v370, 1
        %v461 = vrot.slane %v378, 1
        %v462 = vsel %vm450, %v460, %v461
        %v463 = vrot.slane %v371, 1
        %v464 = vrot.slane %v379, 1
        %v465 = vsel %vm450, %v463, %v464
        %v466 = vrot.slane %v372, 1
        %v467 = vrot.slane %v380, 1
        %v468 = vsel %vm450, %v466, %v467
        %v469 = vrot.slane %v373, 1
        %v470 = vrot.slane %v381, 1
        %v471 = vsel %vm450, %v469, %v470
        %v479 = vpack.c.bf16 %v453, %v453
        %v480 = vpack.c.bf16 %v456, %v456
        %v481 = vpack.c.bf16 %v459, %v459
        %v482 = vpack.c.bf16 %v462, %v462
        %v483 = vpack.c.bf16 %v465, %v465
        %v484 = vpack.c.bf16 %v468, %v468
        %v485 = vpack.c.bf16 %v471, %v471
        %493 = vrot.lane.b32.xlu0 %v479, 32
        %v494 = vpop.permute.xlu0 %493
        %495 = vrot.lane.b32.xlu0 %v480, 32
        %v496 = vpop.permute.xlu0 %495
        %497 = vrot.lane.b32.xlu0 %v481, 32
        %v498 = vpop.permute.xlu0 %497
        %499 = vrot.lane.b32.xlu0 %v482, 32
        %v500 = vpop.permute.xlu0 %499
        %501 = vrot.lane.b32.xlu0 %v483, 32
        %v502 = vpop.permute.xlu0 %501
        %503 = vrot.lane.b32.xlu0 %v484, 32
        %v504 = vpop.permute.xlu0 %503
        %505 = vrot.lane.b32.xlu0 %v485, 32
        %v506 = vpop.permute.xlu0 %505
        %vm514 = vcmask 519424
        %515 = vst.msk [vmem:[#allocation2] sm:$0xf] %vm514, %v494
        %516 = vst.msk [vmem:[#allocation2 + $0xc] sm:$0xf] %vm514, %v496
        %517 = vst.msk [vmem:[#allocation2 + $0x18] sm:$0xf] %vm514, %v494
        %518 = vst.msk [vmem:[#allocation2 + $0x24] sm:$0xf] %vm514, %v498
        %519 = vst.msk [vmem:[#allocation2 + $0x30] sm:$0xf] %vm514, %v500
        %520 = vst.msk [vmem:[#allocation2 + $0x3c] sm:$0xf] %vm514, %v502
        %521 = vst.msk [vmem:[#allocation2 + $0x48] sm:$0xf] %vm514, %v504
        %522 = vst.msk [vmem:[#allocation2 + $0x54] sm:$0xf] %vm514, %v506
        %vm523 = vcmask 1045504
        %v524 = vrot.slane %v367, 2
        %v525 = vrot.slane %v375, 2
        %v526 = vsel %vm523, %v524, %v525
        %v527 = vrot.slane %v368, 2
        %v528 = vrot.slane %v376, 2
        %v529 = vsel %vm523, %v527, %v528
        %v530 = vrot.slane %v369, 2
        %v531 = vrot.slane %v377, 2
        %v532 = vsel %vm523, %v530, %v531
        %v533 = vrot.slane %v370, 2
        %v534 = vrot.slane %v378, 2
        %v535 = vsel %vm523, %v533, %v534
        %v536 = vrot.slane %v371, 2
        %v537 = vrot.slane %v379, 2
        %v538 = vsel %vm523, %v536, %v537
        %v539 = vrot.slane %v372, 2
        %v540 = vrot.slane %v380, 2
        %v541 = vsel %vm523, %v539, %v540
        %v542 = vrot.slane %v373, 2
        %v543 = vrot.slane %v381, 2
        %v544 = vsel %vm523, %v542, %v543
        %v552 = vpack.c.bf16 %v526, %v526
        %v553 = vpack.c.bf16 %v529, %v529
        %v554 = vpack.c.bf16 %v532, %v532
        %v555 = vpack.c.bf16 %v535, %v535
        %v556 = vpack.c.bf16 %v538, %v538
        %v557 = vpack.c.bf16 %v541, %v541
        %v558 = vpack.c.bf16 %v544, %v544
        %566 = vrot.lane.b32.xlu0 %v552, 64
        %v567 = vpop.permute.xlu0 %566
        %568 = vrot.lane.b32.xlu0 %v553, 64
        %v569 = vpop.permute.xlu0 %568
        %570 = vrot.lane.b32.xlu0 %v554, 64
        %v571 = vpop.permute.xlu0 %570
        %572 = vrot.lane.b32.xlu0 %v555, 64
        %v573 = vpop.permute.xlu0 %572
        %574 = vrot.lane.b32.xlu0 %v556, 64
        %v575 = vpop.permute.xlu0 %574
        %576 = vrot.lane.b32.xlu0 %v557, 64
        %v577 = vpop.permute.xlu0 %576
        %578 = vrot.lane.b32.xlu0 %v558, 64
        %v579 = vpop.permute.xlu0 %578
        %vm587 = vcmask 781824
        %588 = vst.msk [vmem:[#allocation2] sm:$0xf] %vm587, %v567
        %589 = vst.msk [vmem:[#allocation2 + $0xc] sm:$0xf] %vm587, %v569
        %590 = vst.msk [vmem:[#allocation2 + $0x18] sm:$0xf] %vm587, %v567
        %591 = vst.msk [vmem:[#allocation2 + $0x24] sm:$0xf] %vm587, %v571
        %592 = vst.msk [vmem:[#allocation2 + $0x30] sm:$0xf] %vm587, %v573
        %593 = vst.msk [vmem:[#allocation2 + $0x3c] sm:$0xf] %vm587, %v575
        %594 = vst.msk [vmem:[#allocation2 + $0x48] sm:$0xf] %vm587, %v577
        %595 = vst.msk [vmem:[#allocation2 + $0x54] sm:$0xf] %vm587, %v579
        %v596 = vpack.c.bf16 %v374, %v374
        %605 = vrot.lane.b32.xlu0 %v421, 96
        %v606 = vpop.permute.xlu0 %605
        %607 = vrot.lane.b32.xlu0 %v420, 96
        %v608 = vpop.permute.xlu0 %607
        %609 = vrot.lane.b32.xlu0 %v422, 96
        %v610 = vpop.permute.xlu0 %609
        %611 = vrot.lane.b32.xlu0 %v423, 96
        %v612 = vpop.permute.xlu0 %611
        %613 = vrot.lane.b32.xlu0 %v424, 96
        %v614 = vpop.permute.xlu0 %613
        %615 = vrot.lane.b32.xlu0 %v425, 96
        %v616 = vpop.permute.xlu0 %615
        %617 = vrot.lane.b32.xlu0 %v426, 96
        %v618 = vpop.permute.xlu0 %617
        %619 = vrot.lane.b32.xlu0 %v596, 96
        %v620 = vpop.permute.xlu0 %619
        %vm629 = vcmask 1044224
        %630 = vst.msk [vmem:[#allocation2] sm:$0xf] %vm629, %v606
        %631 = vst.msk [vmem:[#allocation2 + $0xc] sm:$0xf] %vm629, %v608
        %632 = vst.msk [vmem:[#allocation2 + $0x18] sm:$0xf] %vm629, %v610
        %633 = vst.msk [vmem:[#allocation2 + $0x24] sm:$0xf] %vm629, %v612
        %634 = vst.msk [vmem:[#allocation2 + $0x30] sm:$0xf] %vm629, %v614
        %635 = vst.msk [vmem:[#allocation2 + $0x3c] sm:$0xf] %vm629, %v616
        %636 = vst.msk [vmem:[#allocation2 + $0x48] sm:$0xf] %vm629, %v618
        %637 = vst.msk [vmem:[#allocation2 + $0x54] sm:$0xf] %vm629, %v620
        %v640 = vrot.slane %v374, 1
        %v641 = vrot.slane %v382, 1
        %v642 = vsel %vm450, %v640, %v641
        %v644 = vpack.c.bf16 %v642, %v642
        %645 = vst.msk [vmem:[#allocation2 + $0x4] sm:$0xf] %vm427, %v480
        %646 = vst.msk [vmem:[#allocation2 + $0x10] sm:$0xf] %vm427, %v479
        %647 = vst.msk [vmem:[#allocation2 + $0x1c] sm:$0xf] %vm427, %v481
        %648 = vst.msk [vmem:[#allocation2 + $0x28] sm:$0xf] %vm427, %v482
        %649 = vst.msk [vmem:[#allocation2 + $0x34] sm:$0xf] %vm427, %v483
        %650 = vst.msk [vmem:[#allocation2 + $0x40] sm:$0xf] %vm427, %v484
        %651 = vst.msk [vmem:[#allocation2 + $0x4c] sm:$0xf] %vm427, %v485
        %652 = vst.msk [vmem:[#allocation2 + $0x58] sm:$0xf] %vm427, %v644
        %v653 = vrot.slane %v374, 2
        %v654 = vrot.slane %v382, 2
        %v655 = vsel %vm523, %v653, %v654
        %v657 = vpack.c.bf16 %v655, %v655
        %659 = vrot.lane.b32.xlu0 %v553, 32
        %v660 = vpop.permute.xlu0 %659
        %661 = vrot.lane.b32.xlu0 %v552, 32
        %v662 = vpop.permute.xlu0 %661
        %663 = vrot.lane.b32.xlu0 %v554, 32
        %v664 = vpop.permute.xlu0 %663
        %665 = vrot.lane.b32.xlu0 %v555, 32
        %v666 = vpop.permute.xlu0 %665
        %667 = vrot.lane.b32.xlu0 %v556, 32
        %v668 = vpop.permute.xlu0 %667
        %669 = vrot.lane.b32.xlu0 %v557, 32
        %v670 = vpop.permute.xlu0 %669
        %671 = vrot.lane.b32.xlu0 %v558, 32
        %v672 = vpop.permute.xlu0 %671
        %673 = vrot.lane.b32.xlu0 %v657, 32
        %v674 = vpop.permute.xlu0 %673
        %683 = vst.msk [vmem:[#allocation2 + $0x4] sm:$0xf] %vm514, %v660
        %684 = vst.msk [vmem:[#allocation2 + $0x10] sm:$0xf] %vm514, %v662
        %685 = vst.msk [vmem:[#allocation2 + $0x1c] sm:$0xf] %vm514, %v664
        %686 = vst.msk [vmem:[#allocation2 + $0x28] sm:$0xf] %vm514, %v666
        %687 = vst.msk [vmem:[#allocation2 + $0x34] sm:$0xf] %vm514, %v668
        %688 = vst.msk [vmem:[#allocation2 + $0x40] sm:$0xf] %vm514, %v670
        %689 = vst.msk [vmem:[#allocation2 + $0x4c] sm:$0xf] %vm514, %v672
        %690 = vst.msk [vmem:[#allocation2 + $0x58] sm:$0xf] %vm514, %v674
        %691 = vrot.lane.b32.xlu0 %v420, 64
        %v692 = vpop.permute.xlu0 %691
        %693 = vrot.lane.b32.xlu0 %v422, 64
        %v694 = vpop.permute.xlu0 %693
        %695 = vrot.lane.b32.xlu0 %v423, 64
        %v696 = vpop.permute.xlu0 %695
        %697 = vrot.lane.b32.xlu0 %v424, 64
        %v698 = vpop.permute.xlu0 %697
        %699 = vrot.lane.b32.xlu0 %v425, 64
        %v700 = vpop.permute.xlu0 %699
        %701 = vrot.lane.b32.xlu0 %v426, 64
        %v702 = vpop.permute.xlu0 %701
        %703 = vrot.lane.b32.xlu0 %v596, 64
        %v704 = vpop.permute.xlu0 %703
        %712 = vst.msk [vmem:[#allocation2 + $0x4] sm:$0xf] %vm587, %v692
        %713 = vst.msk [vmem:[#allocation2 + $0x10] sm:$0xf] %vm587, %v694
        %714 = vst.msk [vmem:[#allocation2 + $0x1c] sm:$0xf] %vm587, %v696
        %715 = vst.msk [vmem:[#allocation2 + $0x28] sm:$0xf] %vm587, %v698
        %716 = vst.msk [vmem:[#allocation2 + $0x34] sm:$0xf] %vm587, %v700
        %717 = vst.msk [vmem:[#allocation2 + $0x40] sm:$0xf] %vm587, %v702
        %718 = vst.msk [vmem:[#allocation2 + $0x4c] sm:$0xf] %vm587, %v704
        %719 = vst.msk [vmem:[#allocation2 + $0x58] sm:$0xf] %vm587, %v702
        %721 = vrot.lane.b32.xlu0 %v479, 96
        %v722 = vpop.permute.xlu0 %721
        %723 = vrot.lane.b32.xlu0 %v481, 96
        %v724 = vpop.permute.xlu0 %723
        %725 = vrot.lane.b32.xlu0 %v482, 96
        %v726 = vpop.permute.xlu0 %725
        %727 = vrot.lane.b32.xlu0 %v483, 96
        %v728 = vpop.permute.xlu0 %727
        %729 = vrot.lane.b32.xlu0 %v484, 96
        %v730 = vpop.permute.xlu0 %729
        %731 = vrot.lane.b32.xlu0 %v485, 96
        %v732 = vpop.permute.xlu0 %731
        %733 = vrot.lane.b32.xlu0 %v644, 96
        %v734 = vpop.permute.xlu0 %733
        %742 = vst.msk [vmem:[#allocation2 + $0x4] sm:$0xf] %vm629, %v722
        %743 = vst.msk [vmem:[#allocation2 + $0x10] sm:$0xf] %vm629, %v724
        %744 = vst.msk [vmem:[#allocation2 + $0x1c] sm:$0xf] %vm629, %v726
        %745 = vst.msk [vmem:[#allocation2 + $0x28] sm:$0xf] %vm629, %v728
        %746 = vst.msk [vmem:[#allocation2 + $0x34] sm:$0xf] %vm629, %v730
        %747 = vst.msk [vmem:[#allocation2 + $0x40] sm:$0xf] %vm629, %v732
        %748 = vst.msk [vmem:[#allocation2 + $0x4c] sm:$0xf] %vm629, %v734
        %749 = vst.msk [vmem:[#allocation2 + $0x58] sm:$0xf] %vm629, %v732
        %750 = vst.msk [vmem:[#allocation2 + $0x8] sm:$0xf] %vm427, %v552
        %751 = vst.msk [vmem:[#allocation2 + $0x14] sm:$0xf] %vm427, %v554
        %752 = vst.msk [vmem:[#allocation2 + $0x20] sm:$0xf] %vm427, %v555
        %753 = vst.msk [vmem:[#allocation2 + $0x2c] sm:$0xf] %vm427, %v556
        %754 = vst.msk [vmem:[#allocation2 + $0x38] sm:$0xf] %vm427, %v557
        %755 = vst.msk [vmem:[#allocation2 + $0x44] sm:$0xf] %vm427, %v558
        %756 = vst.msk [vmem:[#allocation2 + $0x50] sm:$0xf] %vm427, %v657
        %757 = vst.msk [vmem:[#allocation2 + $0x5c] sm:$0xf] %vm427, %v558
        %v758 = vld [vmem:[#allocation2] sm:$0xff]
        %v759 = vld [vmem:[#allocation2 + $0x8] sm:$0xf]
        %v760 = vld [vmem:[#allocation2 + $0xc] sm:$0xff]
        %v761 = vld [vmem:[#allocation2 + $0x14] sm:$0xf]
        %v762 = vld [vmem:[#allocation2 + $0x18] sm:$0xff]
        %v763 = vld [vmem:[#allocation2 + $0x20] sm:$0xf]
        %v764 = vld [vmem:[#allocation2 + $0x24] sm:$0xff]
        %v765 = vld [vmem:[#allocation2 + $0x2c] sm:$0xf]
        %v766 = vld [vmem:[#allocation2 + $0x30] sm:$0xff]
        %v767 = vld [vmem:[#allocation2 + $0x38] sm:$0xf]
        %v768 = vld [vmem:[#allocation2 + $0x3c] sm:$0xff]
        %v769 = vld [vmem:[#allocation2 + $0x44] sm:$0xf]
        %v770 = vld [vmem:[#allocation2 + $0x48] sm:$0xff]
        %v771 = vld [vmem:[#allocation2 + $0x50] sm:$0xf]
        %v772 = vld [vmem:[#allocation2 + $0x54] sm:$0xff]
        %v773 = vld [vmem:[#allocation2 + $0x5c] sm:$0xf]
        %v775 = vperm.slane %v419, 0
        %v793 = vunpack.c.l.b16 %v758
        %v794 = vunpack.c.h.b16 %v758
        %v795 = vunpack.c.l.b16 %v759
        %v796 = vunpack.c.l.b16 %v760
        %v797 = vunpack.c.h.b16 %v760
        %v798 = vunpack.c.l.b16 %v761
        %v799 = vunpack.c.l.b16 %v762
        %v800 = vunpack.c.h.b16 %v762
        %v801 = vunpack.c.l.b16 %v763
        %v802 = vunpack.c.l.b16 %v764
        %v803 = vunpack.c.h.b16 %v764
        %v804 = vunpack.c.l.b16 %v765
        %v805 = vunpack.c.l.b16 %v766
        %v806 = vunpack.c.h.b16 %v766
        %v807 = vunpack.c.l.b16 %v767
        %v808 = vunpack.c.l.b16 %v768
        %v809 = vunpack.c.h.b16 %v768
        %v810 = vunpack.c.l.b16 %v769
        %v811 = vunpack.c.l.b16 %v770
        %v812 = vunpack.c.h.b16 %v770
        %v813 = vunpack.c.l.b16 %v771
        %v814 = vunpack.c.l.b16 %v772
        %v815 = vunpack.c.h.b16 %v772
        %v816 = vunpack.c.l.b16 %v773
        %v817 = vpack.c.b16 %v796, %v793
        %v818 = vpack.c.b16 %v797, %v794
        %v819 = vpack.c.b16 %v798, %v795
        %v820 = vpack.c.b16 %v802, %v799
        %v821 = vpack.c.b16 %v803, %v800
        %v822 = vpack.c.b16 %v804, %v801
        %v823 = vpack.c.b16 %v808, %v805
        %v824 = vpack.c.b16 %v809, %v806
        %v825 = vpack.c.b16 %v810, %v807
        %v826 = vpack.c.b16 %v814, %v811
        %v827 = vpack.c.b16 %v815, %v812
        %v828 = vpack.c.b16 %v816, %v813
        %v873 = vunpack.c.l.b16 %v383
        %v874 = vunpack.c.l.b16 %v384
        %v875 = vunpack.c.l.b16 %v385
        %v876 = vunpack.c.l.b16 %v386
        %v877 = vunpack.c.l.b16 %v387
        %v878 = vunpack.c.l.b16 %v388
        %v879 = vunpack.c.l.b16 %v389
        %v880 = vunpack.c.l.b16 %v390
        %v881 = vunpack.c.l.b16 %v391
        %v882 = vunpack.c.l.b16 %v392
        %v883 = vunpack.c.l.b16 %v393
        %v884 = vunpack.c.l.b16 %v394
        %v885 = vunpack.c.l.b16 %v395
        %v886 = vunpack.c.l.b16 %v396
        %v887 = vunpack.c.l.b16 %v397
        %v888 = vunpack.c.l.b16 %v398
        %v889 = vunpack.c.l.b16 %v399
        %v890 = vunpack.c.l.b16 %v400
        %v891 = vunpack.c.l.b16 %v401
        %v892 = vunpack.c.l.b16 %v402
        %v893 = vunpack.c.l.b16 %v403
        %v894 = vunpack.c.l.b16 %v404
        %v895 = vunpack.c.l.b16 %v405
        %v896 = vunpack.c.l.b16 %v406
        %v897 = vunpack.c.l.b16 %v407
        %v898 = vunpack.c.l.b16 %v408
        %v899 = vunpack.c.l.b16 %v409
        %v900 = vunpack.c.l.b16 %v410
        %v901 = vunpack.c.l.b16 %v411
        %v902 = vunpack.c.l.b16 %v412
        %v903 = vunpack.c.l.b16 %v413
        %v904 = vunpack.c.l.b16 %v414
        %v905 = vunpack.c.l.b16 %v415
        %v906 = vunpack.c.l.b16 %v416
        %v907 = vunpack.c.l.b16 %v417
        %v908 = vunpack.c.l.b16 %v418
        %v909 = vpack.c.b16 %v874, %v873
        %v910 = vpack.c.b16 %v876, %v875
        %v911 = vpack.c.b16 %v878, %v877
        %v912 = vpack.c.b16 %v880, %v879
        %v913 = vpack.c.b16 %v882, %v881
        %v914 = vpack.c.b16 %v884, %v883
        %v915 = vpack.c.b16 %v886, %v885
        %v916 = vpack.c.b16 %v888, %v887
        %v917 = vpack.c.b16 %v890, %v889
        %v918 = vpack.c.b16 %v892, %v891
        %v919 = vpack.c.b16 %v894, %v893
        %v920 = vpack.c.b16 %v896, %v895
        %v921 = vpack.c.b16 %v898, %v897
        %v922 = vpack.c.b16 %v900, %v899
        %v923 = vpack.c.b16 %v902, %v901
        %v924 = vpack.c.b16 %v904, %v903
        %v925 = vpack.c.b16 %v906, %v905
        %v926 = vpack.c.b16 %v908, %v907
        %vm945 = vcmask 261120
        %v947 = vsel %vm945, %v819, 0
        %v950 = vsel %vm945, %v822, 0
        %v953 = vsel %vm945, %v825, 0
        %v956 = vsel %vm945, %v828, 0
        %958 = vmatpush.bf16.msra.mxu0 %v916
        %959 = vmatpush.bf16.msra.mxu0 %v915
        %960 = vmatpush.bf16.msra.mxu0 %v914
        %961 = vmatpush.bf16.msra.mxu0 %v913
        %962 = vmatpush.bf16.msra.mxu0 %v912
        %963 = vmatpush.bf16.msra.mxu0 %v911
        %964 = vmatpush.bf16.msra.mxu0 %v910
        %965 = vmatpush.bf16.msra.mxu0 %v909
        %966 = vmatmul.bf16.gmra.mxu0 %v817
        %v967 = vpop.f32.mrf.mxu0
        %v968 = vadd.f32 %v775, %v967
        %v969 = vpop.f32.mrf.mxu0
        %v970 = vadd.f32 %v775, %v969
        %971 = vmatmul.bf16.gmra.mxu0 %v820
        %v972 = vpop.f32.mrf.mxu0
        %v973 = vadd.f32 %v775, %v972
        %v974 = vpop.f32.mrf.mxu0
        %v975 = vadd.f32 %v775, %v974
        %976 = vmatmul.bf16.gmra.mxu0 %v823
        %v977 = vpop.f32.mrf.mxu0
        %v978 = vadd.f32 %v775, %v977
        %v979 = vpop.f32.mrf.mxu0
        %v980 = vadd.f32 %v775, %v979
        %981 = vmatmul.bf16.gmra.mxu0 %v826
        %v982 = vpop.f32.mrf.mxu0
        %v983 = vadd.f32 %v775, %v982
        %v984 = vpop.f32.mrf.mxu0
        %v985 = vadd.f32 %v775, %v984
        %986 = vdwg.mxu0
        %987 = vmatpush.bf16.msra.mxu0 %v924
        %988 = vmatpush.bf16.msra.mxu0 %v923
        %989 = vmatpush.bf16.msra.mxu0 %v922
        %990 = vmatpush.bf16.msra.mxu0 %v921
        %991 = vmatpush.bf16.msra.mxu0 %v920
        %992 = vmatpush.bf16.msra.mxu0 %v919
        %993 = vmatpush.bf16.msra.mxu0 %v918
        %994 = vmatpush.bf16.msra.mxu0 %v917
        %995 = vmatmul.bf16.gmra.mxu0 %v818
        %v996 = vpop.f32.mrf.mxu0
        %v997 = vadd.f32 %v968, %v996
        %v998 = vpop.f32.mrf.mxu0
        %v999 = vadd.f32 %v970, %v998
        %1000 = vmatmul.bf16.gmra.mxu0 %v821
        %v1001 = vpop.f32.mrf.mxu0
        %v1002 = vadd.f32 %v973, %v1001
        %v1003 = vpop.f32.mrf.mxu0
        %v1004 = vadd.f32 %v975, %v1003
        %1005 = vmatmul.bf16.gmra.mxu0 %v824
        %v1006 = vpop.f32.mrf.mxu0
        %v1007 = vadd.f32 %v978, %v1006
        %v1008 = vpop.f32.mrf.mxu0
        %v1009 = vadd.f32 %v980, %v1008
        %1010 = vmatmul.bf16.gmra.mxu0 %v827
        %v1011 = vpop.f32.mrf.mxu0
        %v1012 = vadd.f32 %v983, %v1011
        %v1013 = vpop.f32.mrf.mxu0
        %v1014 = vadd.f32 %v985, %v1013
        %1015 = vdwg.mxu0
        %1016 = vmatpush.bf16.msra.mxu0 0
        %1017 = vmatpush.bf16.msra.mxu0 0
        %1018 = vmatpush.bf16.msra.mxu0 0
        %1019 = vmatpush.bf16.msra.mxu0 0
        %1020 = vmatpush.bf16.msra.mxu0 0
        %1021 = vmatpush.bf16.msra.mxu0 0
        %1022 = vmatpush.bf16.msra.mxu0 %v926
        %1023 = vmatpush.bf16.msra.mxu0 %v925
        %1024 = vmatmul.bf16.gmra.mxu0 %v947
        %v1025 = vpop.f32.mrf.mxu0
        %v1026 = vadd.f32 %v997, %v1025
        %v1027 = vpop.f32.mrf.mxu0
        %v1028 = vadd.f32 %v999, %v1027
        %1029 = vmatmul.bf16.gmra.mxu0 %v950
        %v1030 = vpop.f32.mrf.mxu0
        %v1031 = vadd.f32 %v1002, %v1030
        %v1032 = vpop.f32.mrf.mxu0
        %v1033 = vadd.f32 %v1004, %v1032
        %1034 = vmatmul.bf16.gmra.mxu0 %v953
        %v1035 = vpop.f32.mrf.mxu0
        %v1036 = vadd.f32 %v1007, %v1035
        %v1037 = vpop.f32.mrf.mxu0
        %v1038 = vadd.f32 %v1009, %v1037
        %1039 = vmatmul.bf16.gmra.mxu0 %v956
        %v1040 = vpop.f32.mrf.mxu0
        %v1041 = vadd.f32 %v1012, %v1040
        %v1042 = vpop.f32.mrf.mxu0
        %v1043 = vadd.f32 %v1014, %v1042
        %1044 = vdwg.mxu0
        %v1053 = vrot.slane %v1028, 1
        %v1054 = vrot.slane %v1026, 1
        %v1055 = vrot.slane %v1031, 1
        %v1056 = vrot.slane %v1033, 1
        %v1057 = vrot.slane %v1036, 1
        %v1058 = vrot.slane %v1038, 1
        %v1059 = vrot.slane %v1041, 1
        %v1060 = vrot.slane %v1043, 1
        %v1069 = vrot.slane %v1028, 7
        %v1070 = vrot.slane %v1026, 7
        %v1071 = vrot.slane %v1031, 7
        %v1072 = vrot.slane %v1033, 7
        %v1073 = vrot.slane %v1036, 7
        %v1074 = vrot.slane %v1038, 7
        %v1075 = vrot.slane %v1041, 7
        %v1076 = vrot.slane %v1043, 7
        %v1085 = vrot.slane %v1028, 5
        %v1086 = vrot.slane %v1026, 5
        %v1087 = vrot.slane %v1031, 5
        %v1088 = vrot.slane %v1033, 5
        %v1089 = vrot.slane %v1036, 5
        %v1090 = vrot.slane %v1038, 5
        %v1091 = vrot.slane %v1041, 5
        %v1092 = vrot.slane %v1043, 5
        %v1101 = vsel %vm366, %v1053, %v1069
        %v1102 = vsel %vm366, %v1054, %v1070
        %v1103 = vsel %vm366, %v1055, %v1071
        %v1104 = vsel %vm366, %v1056, %v1072
        %v1105 = vsel %vm366, %v1057, %v1073
        %v1106 = vsel %vm366, %v1058, %v1074
        %v1107 = vsel %vm366, %v1059, %v1075
        %v1108 = vsel %vm366, %v1060, %v1076
        %v1109 = vsel %vm366, %v1069, %v1085
        %v1110 = vsel %vm366, %v1070, %v1086
        %v1111 = vsel %vm366, %v1071, %v1087
        %v1112 = vsel %vm366, %v1072, %v1088
        %v1113 = vsel %vm366, %v1073, %v1089
        %v1114 = vsel %vm366, %v1074, %v1090
        %v1115 = vsel %vm366, %v1075, %v1091
        %v1116 = vsel %vm366, %v1076, %v1092
        %v1117 = vld [vmem:[%s3] sm:$0xf]
        %v1118 = vld [vmem:[%s3 + $0x4] sm:$0xf]
        %v1119 = vld [vmem:[%s3 + $0x8] sm:$0xf]
        %v1120 = vld [vmem:[%s3 + $0xc] sm:$0xf]
        %v1121 = vld [vmem:[%s3 + $0x10] sm:$0xf]
        %v1122 = vld [vmem:[%s3 + $0x14] sm:$0xf]
        %v1123 = vld [vmem:[%s3 + $0x18] sm:$0xf]
        %v1124 = vld [vmem:[%s3 + $0x1c] sm:$0xf]
        %v1125 = vld [vmem:[%s3 + $0x20] sm:$0xf]
        %v1126 = vld [vmem:[%s3 + $0x24] sm:$0xf]
        %v1127 = vld [vmem:[%s3 + $0x28] sm:$0xf]
        %v1128 = vld [vmem:[%s3 + $0x2c] sm:$0xf]
        %v1129 = vld [vmem:[%s3 + $0x30] sm:$0xf]
        %v1130 = vld [vmem:[%s3 + $0x34] sm:$0xf]
        %v1131 = vld [vmem:[%s3 + $0x38] sm:$0xf]
        %v1132 = vld [vmem:[%s3 + $0x3c] sm:$0xf]
        %v1133 = vld [vmem:[%s3 + $0x40] sm:$0xf]
        %v1134 = vld [vmem:[%s3 + $0x44] sm:$0xf]
        %v1135 = vld [vmem:[%s3 + $0x48] sm:$0xf]
        %v1136 = vld [vmem:[%s3 + $0x4c] sm:$0xf]
        %v1137 = vld [vmem:[%s3 + $0x50] sm:$0xf]
        %v1138 = vld [vmem:[%s3 + $0x54] sm:$0xf]
        %v1139 = vld [vmem:[%s3 + $0x58] sm:$0xf]
        %v1140 = vld [vmem:[%s3 + $0x5c] sm:$0xf]
        %v1141 = vld [vmem:[%s3 + $0x60] sm:$0xf]
        %v1142 = vld [vmem:[%s3 + $0x64] sm:$0xf]
        %v1143 = vld [vmem:[%s3 + $0x68] sm:$0xf]
        %v1144 = vld [vmem:[%s3 + $0x6c] sm:$0xf]
        %v1145 = vld [vmem:[%s3 + $0x70] sm:$0xf]
        %v1146 = vld [vmem:[%s3 + $0x74] sm:$0xf]
        %v1147 = vld [vmem:[%s3 + $0x78] sm:$0xf]
        %v1148 = vld [vmem:[%s3 + $0x7c] sm:$0xf]
        %v1149 = vld [vmem:[%s3 + $0x80] sm:$0xf]
        %v1150 = vld [vmem:[%s3 + $0x84] sm:$0xf]
        %v1151 = vld [vmem:[%s3 + $0x88] sm:$0xf]
        %v1152 = vld [vmem:[%s3 + $0x8c] sm:$0xf]
        %v1153 = vld [vmem:[%s4] sm:$0x1]
        %v1154 = vpack.c.bf16 %v1101, %v1101
        %v1155 = vpack.c.bf16 %v1102, %v1102
        %v1156 = vpack.c.bf16 %v1103, %v1103
        %v1157 = vpack.c.bf16 %v1104, %v1104
        %v1158 = vpack.c.bf16 %v1105, %v1105
        %v1159 = vpack.c.bf16 %v1106, %v1106
        %v1160 = vpack.c.bf16 %v1107, %v1107
        %1161 = vst.msk [vmem:[#allocation2] sm:$0xf] %vm427, %v1154
        %1162 = vst.msk [vmem:[#allocation2 + $0xc] sm:$0xf] %vm427, %v1155
        %1163 = vst.msk [vmem:[#allocation2 + $0x18] sm:$0xf] %vm427, %v1154
        %1164 = vst.msk [vmem:[#allocation2 + $0x24] sm:$0xf] %vm427, %v1156
        %1165 = vst.msk [vmem:[#allocation2 + $0x30] sm:$0xf] %vm427, %v1157
        %1166 = vst.msk [vmem:[#allocation2 + $0x3c] sm:$0xf] %vm427, %v1158
        %1167 = vst.msk [vmem:[#allocation2 + $0x48] sm:$0xf] %vm427, %v1159
        %1168 = vst.msk [vmem:[#allocation2 + $0x54] sm:$0xf] %vm427, %v1160
        %v1183 = vrot.slane %v1101, 1
        %v1184 = vrot.slane %v1109, 1
        %v1185 = vsel %vm450, %v1183, %v1184
        %v1186 = vrot.slane %v1102, 1
        %v1187 = vrot.slane %v1110, 1
        %v1188 = vsel %vm450, %v1186, %v1187
        %v1189 = vrot.slane %v1103, 1
        %v1190 = vrot.slane %v1111, 1
        %v1191 = vsel %vm450, %v1189, %v1190
        %v1192 = vrot.slane %v1104, 1
        %v1193 = vrot.slane %v1112, 1
        %v1194 = vsel %vm450, %v1192, %v1193
        %v1195 = vrot.slane %v1105, 1
        %v1196 = vrot.slane %v1113, 1
        %v1197 = vsel %vm450, %v1195, %v1196
        %v1198 = vrot.slane %v1106, 1
        %v1199 = vrot.slane %v1114, 1
        %v1200 = vsel %vm450, %v1198, %v1199
        %v1201 = vrot.slane %v1107, 1
        %v1202 = vrot.slane %v1115, 1
        %v1203 = vsel %vm450, %v1201, %v1202
        %v1211 = vpack.c.bf16 %v1185, %v1185
        %v1212 = vpack.c.bf16 %v1188, %v1188
        %v1213 = vpack.c.bf16 %v1191, %v1191
        %v1214 = vpack.c.bf16 %v1194, %v1194
        %v1215 = vpack.c.bf16 %v1197, %v1197
        %v1216 = vpack.c.bf16 %v1200, %v1200
        %v1217 = vpack.c.bf16 %v1203, %v1203
        %1225 = vrot.lane.b32.xlu0 %v1211, 32
        %v1226 = vpop.permute.xlu0 %1225
        %1227 = vrot.lane.b32.xlu0 %v1212, 32
        %v1228 = vpop.permute.xlu0 %1227
        %1229 = vrot.lane.b32.xlu0 %v1213, 32
        %v1230 = vpop.permute.xlu0 %1229
        %1231 = vrot.lane.b32.xlu0 %v1214, 32
        %v1232 = vpop.permute.xlu0 %1231
        %1233 = vrot.lane.b32.xlu0 %v1215, 32
        %v1234 = vpop.permute.xlu0 %1233
        %1235 = vrot.lane.b32.xlu0 %v1216, 32
        %v1236 = vpop.permute.xlu0 %1235
        %1237 = vrot.lane.b32.xlu0 %v1217, 32
        %v1238 = vpop.permute.xlu0 %1237
        %1246 = vst.msk [vmem:[#allocation2] sm:$0xf] %vm514, %v1226
        %1247 = vst.msk [vmem:[#allocation2 + $0xc] sm:$0xf] %vm514, %v1228
        %1248 = vst.msk [vmem:[#allocation2 + $0x18] sm:$0xf] %vm514, %v1226
        %1249 = vst.msk [vmem:[#allocation2 + $0x24] sm:$0xf] %vm514, %v1230
        %1250 = vst.msk [vmem:[#allocation2 + $0x30] sm:$0xf] %vm514, %v1232
        %1251 = vst.msk [vmem:[#allocation2 + $0x3c] sm:$0xf] %vm514, %v1234
        %1252 = vst.msk [vmem:[#allocation2 + $0x48] sm:$0xf] %vm514, %v1236
        %1253 = vst.msk [vmem:[#allocation2 + $0x54] sm:$0xf] %vm514, %v1238
        %v1254 = vrot.slane %v1101, 2
        %v1255 = vrot.slane %v1109, 2
        %v1256 = vsel %vm523, %v1254, %v1255
        %v1257 = vrot.slane %v1102, 2
        %v1258 = vrot.slane %v1110, 2
        %v1259 = vsel %vm523, %v1257, %v1258
        %v1260 = vrot.slane %v1103, 2
        %v1261 = vrot.slane %v1111, 2
        %v1262 = vsel %vm523, %v1260, %v1261
        %v1263 = vrot.slane %v1104, 2
        %v1264 = vrot.slane %v1112, 2
        %v1265 = vsel %vm523, %v1263, %v1264
        %v1266 = vrot.slane %v1105, 2
        %v1267 = vrot.slane %v1113, 2
        %v1268 = vsel %vm523, %v1266, %v1267
        %v1269 = vrot.slane %v1106, 2
        %v1270 = vrot.slane %v1114, 2
        %v1271 = vsel %vm523, %v1269, %v1270
        %v1272 = vrot.slane %v1107, 2
        %v1273 = vrot.slane %v1115, 2
        %v1274 = vsel %vm523, %v1272, %v1273
        %v1282 = vpack.c.bf16 %v1256, %v1256
        %v1283 = vpack.c.bf16 %v1259, %v1259
        %v1284 = vpack.c.bf16 %v1262, %v1262
        %v1285 = vpack.c.bf16 %v1265, %v1265
        %v1286 = vpack.c.bf16 %v1268, %v1268
        %v1287 = vpack.c.bf16 %v1271, %v1271
        %v1288 = vpack.c.bf16 %v1274, %v1274
        %1296 = vrot.lane.b32.xlu0 %v1282, 64
        %v1297 = vpop.permute.xlu0 %1296
        %1298 = vrot.lane.b32.xlu0 %v1283, 64
        %v1299 = vpop.permute.xlu0 %1298
        %1300 = vrot.lane.b32.xlu0 %v1284, 64
        %v1301 = vpop.permute.xlu0 %1300
        %1302 = vrot.lane.b32.xlu0 %v1285, 64
        %v1303 = vpop.permute.xlu0 %1302
        %1304 = vrot.lane.b32.xlu0 %v1286, 64
        %v1305 = vpop.permute.xlu0 %1304
        %1306 = vrot.lane.b32.xlu0 %v1287, 64
        %v1307 = vpop.permute.xlu0 %1306
        %1308 = vrot.lane.b32.xlu0 %v1288, 64
        %v1309 = vpop.permute.xlu0 %1308
        %1317 = vst.msk [vmem:[#allocation2] sm:$0xf] %vm587, %v1297
        %1318 = vst.msk [vmem:[#allocation2 + $0xc] sm:$0xf] %vm587, %v1299
        %1319 = vst.msk [vmem:[#allocation2 + $0x18] sm:$0xf] %vm587, %v1297
        %1320 = vst.msk [vmem:[#allocation2 + $0x24] sm:$0xf] %vm587, %v1301
        %1321 = vst.msk [vmem:[#allocation2 + $0x30] sm:$0xf] %vm587, %v1303
        %1322 = vst.msk [vmem:[#allocation2 + $0x3c] sm:$0xf] %vm587, %v1305
        %1323 = vst.msk [vmem:[#allocation2 + $0x48] sm:$0xf] %vm587, %v1307
        %1324 = vst.msk [vmem:[#allocation2 + $0x54] sm:$0xf] %vm587, %v1309
        %v1325 = vpack.c.bf16 %v1108, %v1108
        %1334 = vrot.lane.b32.xlu0 %v1155, 96
        %v1335 = vpop.permute.xlu0 %1334
        %1336 = vrot.lane.b32.xlu0 %v1154, 96
        %v1337 = vpop.permute.xlu0 %1336
        %1338 = vrot.lane.b32.xlu0 %v1156, 96
        %v1339 = vpop.permute.xlu0 %1338
        %1340 = vrot.lane.b32.xlu0 %v1157, 96
        %v1341 = vpop.permute.xlu0 %1340
        %1342 = vrot.lane.b32.xlu0 %v1158, 96
        %v1343 = vpop.permute.xlu0 %1342
        %1344 = vrot.lane.b32.xlu0 %v1159, 96
        %v1345 = vpop.permute.xlu0 %1344
        %1346 = vrot.lane.b32.xlu0 %v1160, 96
        %v1347 = vpop.permute.xlu0 %1346
        %1348 = vrot.lane.b32.xlu0 %v1325, 96
        %v1349 = vpop.permute.xlu0 %1348
        %1358 = vst.msk [vmem:[#allocation2] sm:$0xf] %vm629, %v1335
        %1359 = vst.msk [vmem:[#allocation2 + $0xc] sm:$0xf] %vm629, %v1337
        %1360 = vst.msk [vmem:[#allocation2 + $0x18] sm:$0xf] %vm629, %v1339
        %1361 = vst.msk [vmem:[#allocation2 + $0x24] sm:$0xf] %vm629, %v1341
        %1362 = vst.msk [vmem:[#allocation2 + $0x30] sm:$0xf] %vm629, %v1343
        %1363 = vst.msk [vmem:[#allocation2 + $0x3c] sm:$0xf] %vm629, %v1345
        %1364 = vst.msk [vmem:[#allocation2 + $0x48] sm:$0xf] %vm629, %v1347
        %1365 = vst.msk [vmem:[#allocation2 + $0x54] sm:$0xf] %vm629, %v1349
        %v1368 = vrot.slane %v1108, 1
        %v1369 = vrot.slane %v1116, 1
        %v1370 = vsel %vm450, %v1368, %v1369
        %v1372 = vpack.c.bf16 %v1370, %v1370
        %1373 = vst.msk [vmem:[#allocation2 + $0x4] sm:$0xf] %vm427, %v1212
        %1374 = vst.msk [vmem:[#allocation2 + $0x10] sm:$0xf] %vm427, %v1211
        %1375 = vst.msk [vmem:[#allocation2 + $0x1c] sm:$0xf] %vm427, %v1213
        %1376 = vst.msk [vmem:[#allocation2 + $0x28] sm:$0xf] %vm427, %v1214
        %1377 = vst.msk [vmem:[#allocation2 + $0x34] sm:$0xf] %vm427, %v1215
        %1378 = vst.msk [vmem:[#allocation2 + $0x40] sm:$0xf] %vm427, %v1216
        %1379 = vst.msk [vmem:[#allocation2 + $0x4c] sm:$0xf] %vm427, %v1217
        %1380 = vst.msk [vmem:[#allocation2 + $0x58] sm:$0xf] %vm427, %v1372
        %v1381 = vrot.slane %v1108, 2
        %v1382 = vrot.slane %v1116, 2
        %v1383 = vsel %vm523, %v1381, %v1382
        %v1385 = vpack.c.bf16 %v1383, %v1383
        %1387 = vrot.lane.b32.xlu0 %v1283, 32
        %v1388 = vpop.permute.xlu0 %1387
        %1389 = vrot.lane.b32.xlu0 %v1282, 32
        %v1390 = vpop.permute.xlu0 %1389
        %1391 = vrot.lane.b32.xlu0 %v1284, 32
        %v1392 = vpop.permute.xlu0 %1391
        %1393 = vrot.lane.b32.xlu0 %v1285, 32
        %v1394 = vpop.permute.xlu0 %1393
        %1395 = vrot.lane.b32.xlu0 %v1286, 32
        %v1396 = vpop.permute.xlu0 %1395
        %1397 = vrot.lane.b32.xlu0 %v1287, 32
        %v1398 = vpop.permute.xlu0 %1397
        %1399 = vrot.lane.b32.xlu0 %v1288, 32
        %v1400 = vpop.permute.xlu0 %1399
        %1401 = vrot.lane.b32.xlu0 %v1385, 32
        %v1402 = vpop.permute.xlu0 %1401
        %1411 = vst.msk [vmem:[#allocation2 + $0x4] sm:$0xf] %vm514, %v1388
        %1412 = vst.msk [vmem:[#allocation2 + $0x10] sm:$0xf] %vm514, %v1390
        %1413 = vst.msk [vmem:[#allocation2 + $0x1c] sm:$0xf] %vm514, %v1392
        %1414 = vst.msk [vmem:[#allocation2 + $0x28] sm:$0xf] %vm514, %v1394
        %1415 = vst.msk [vmem:[#allocation2 + $0x34] sm:$0xf] %vm514, %v1396
        %1416 = vst.msk [vmem:[#allocation2 + $0x40] sm:$0xf] %vm514, %v1398
        %1417 = vst.msk [vmem:[#allocation2 + $0x4c] sm:$0xf] %vm514, %v1400
        %1418 = vst.msk [vmem:[#allocation2 + $0x58] sm:$0xf] %vm514, %v1402
        %1419 = vrot.lane.b32.xlu0 %v1154, 64
        %v1420 = vpop.permute.xlu0 %1419
        %1421 = vrot.lane.b32.xlu0 %v1156, 64
        %v1422 = vpop.permute.xlu0 %1421
        %1423 = vrot.lane.b32.xlu0 %v1157, 64
        %v1424 = vpop.permute.xlu0 %1423
        %1425 = vrot.lane.b32.xlu0 %v1158, 64
        %v1426 = vpop.permute.xlu0 %1425
        %1427 = vrot.lane.b32.xlu0 %v1159, 64
        %v1428 = vpop.permute.xlu0 %1427
        %1429 = vrot.lane.b32.xlu0 %v1160, 64
        %v1430 = vpop.permute.xlu0 %1429
        %1431 = vrot.lane.b32.xlu0 %v1325, 64
        %v1432 = vpop.permute.xlu0 %1431
        %1440 = vst.msk [vmem:[#allocation2 + $0x4] sm:$0xf] %vm587, %v1420
        %1441 = vst.msk [vmem:[#allocation2 + $0x10] sm:$0xf] %vm587, %v1422
        %1442 = vst.msk [vmem:[#allocation2 + $0x1c] sm:$0xf] %vm587, %v1424
        %1443 = vst.msk [vmem:[#allocation2 + $0x28] sm:$0xf] %vm587, %v1426
        %1444 = vst.msk [vmem:[#allocation2 + $0x34] sm:$0xf] %vm587, %v1428
        %1445 = vst.msk [vmem:[#allocation2 + $0x40] sm:$0xf] %vm587, %v1430
        %1446 = vst.msk [vmem:[#allocation2 + $0x4c] sm:$0xf] %vm587, %v1432
        %1447 = vst.msk [vmem:[#allocation2 + $0x58] sm:$0xf] %vm587, %v1430
        %1449 = vrot.lane.b32.xlu0 %v1211, 96
        %v1450 = vpop.permute.xlu0 %1449
        %1451 = vrot.lane.b32.xlu0 %v1213, 96
        %v1452 = vpop.permute.xlu0 %1451
        %1453 = vrot.lane.b32.xlu0 %v1214, 96
        %v1454 = vpop.permute.xlu0 %1453
        %1455 = vrot.lane.b32.xlu0 %v1215, 96
        %v1456 = vpop.permute.xlu0 %1455
        %1457 = vrot.lane.b32.xlu0 %v1216, 96
        %v1458 = vpop.permute.xlu0 %1457
        %1459 = vrot.lane.b32.xlu0 %v1217, 96
        %v1460 = vpop.permute.xlu0 %1459
        %1461 = vrot.lane.b32.xlu0 %v1372, 96
        %v1462 = vpop.permute.xlu0 %1461
        %1470 = vst.msk [vmem:[#allocation2 + $0x4] sm:$0xf] %vm629, %v1450
        %1471 = vst.msk [vmem:[#allocation2 + $0x10] sm:$0xf] %vm629, %v1452
        %1472 = vst.msk [vmem:[#allocation2 + $0x1c] sm:$0xf] %vm629, %v1454
        %1473 = vst.msk [vmem:[#allocation2 + $0x28] sm:$0xf] %vm629, %v1456
        %1474 = vst.msk [vmem:[#allocation2 + $0x34] sm:$0xf] %vm629, %v1458
        %1475 = vst.msk [vmem:[#allocation2 + $0x40] sm:$0xf] %vm629, %v1460
        %1476 = vst.msk [vmem:[#allocation2 + $0x4c] sm:$0xf] %vm629, %v1462
        %1477 = vst.msk [vmem:[#allocation2 + $0x58] sm:$0xf] %vm629, %v1460
        %1478 = vst.msk [vmem:[#allocation2 + $0x8] sm:$0xf] %vm427, %v1282
        %1479 = vst.msk [vmem:[#allocation2 + $0x14] sm:$0xf] %vm427, %v1284
        %1480 = vst.msk [vmem:[#allocation2 + $0x20] sm:$0xf] %vm427, %v1285
        %1481 = vst.msk [vmem:[#allocation2 + $0x2c] sm:$0xf] %vm427, %v1286
        %1482 = vst.msk [vmem:[#allocation2 + $0x38] sm:$0xf] %vm427, %v1287
        %1483 = vst.msk [vmem:[#allocation2 + $0x44] sm:$0xf] %vm427, %v1288
        %1484 = vst.msk [vmem:[#allocation2 + $0x50] sm:$0xf] %vm427, %v1385
        %1485 = vst.msk [vmem:[#allocation2 + $0x5c] sm:$0xf] %vm427, %v1288
        %v1486 = vld [vmem:[#allocation2] sm:$0xff]
        %v1487 = vld [vmem:[#allocation2 + $0x8] sm:$0xf]
        %v1488 = vld [vmem:[#allocation2 + $0xc] sm:$0xff]
        %v1489 = vld [vmem:[#allocation2 + $0x14] sm:$0xf]
        %v1490 = vld [vmem:[#allocation2 + $0x18] sm:$0xff]
        %v1491 = vld [vmem:[#allocation2 + $0x20] sm:$0xf]
        %v1492 = vld [vmem:[#allocation2 + $0x24] sm:$0xff]
        %v1493 = vld [vmem:[#allocation2 + $0x2c] sm:$0xf]
        %v1494 = vld [vmem:[#allocation2 + $0x30] sm:$0xff]
        %v1495 = vld [vmem:[#allocation2 + $0x38] sm:$0xf]
        %v1496 = vld [vmem:[#allocation2 + $0x3c] sm:$0xff]
        %v1497 = vld [vmem:[#allocation2 + $0x44] sm:$0xf]
        %v1498 = vld [vmem:[#allocation2 + $0x48] sm:$0xff]
        %v1499 = vld [vmem:[#allocation2 + $0x50] sm:$0xf]
        %v1500 = vld [vmem:[#allocation2 + $0x54] sm:$0xff]
        %v1501 = vld [vmem:[#allocation2 + $0x5c] sm:$0xf]
        %v1503 = vperm.slane %v1153, 0
        %v1521 = vunpack.c.l.b16 %v1486
        %v1522 = vunpack.c.h.b16 %v1486
        %v1523 = vunpack.c.l.b16 %v1487
        %v1524 = vunpack.c.l.b16 %v1488
        %v1525 = vunpack.c.h.b16 %v1488
        %v1526 = vunpack.c.l.b16 %v1489
        %v1527 = vunpack.c.l.b16 %v1490
        %v1528 = vunpack.c.h.b16 %v1490
        %v1529 = vunpack.c.l.b16 %v1491
        %v1530 = vunpack.c.l.b16 %v1492
        %v1531 = vunpack.c.h.b16 %v1492
        %v1532 = vunpack.c.l.b16 %v1493
        %v1533 = vunpack.c.l.b16 %v1494
        %v1534 = vunpack.c.h.b16 %v1494
        %v1535 = vunpack.c.l.b16 %v1495
        %v1536 = vunpack.c.l.b16 %v1496
        %v1537 = vunpack.c.h.b16 %v1496
        %v1538 = vunpack.c.l.b16 %v1497
        %v1539 = vunpack.c.l.b16 %v1498
        %v1540 = vunpack.c.h.b16 %v1498
        %v1541 = vunpack.c.l.b16 %v1499
        %v1542 = vunpack.c.l.b16 %v1500
        %v1543 = vunpack.c.h.b16 %v1500
        %v1544 = vunpack.c.l.b16 %v1501
        %v1545 = vpack.c.b16 %v1524, %v1521
        %v1546 = vpack.c.b16 %v1525, %v1522
        %v1547 = vpack.c.b16 %v1526, %v1523
        %v1548 = vpack.c.b16 %v1530, %v1527
        %v1549 = vpack.c.b16 %v1531, %v1528
        %v1550 = vpack.c.b16 %v1532, %v1529
        %v1551 = vpack.c.b16 %v1536, %v1533
        %v1552 = vpack.c.b16 %v1537, %v1534
        %v1553 = vpack.c.b16 %v1538, %v1535
        %v1554 = vpack.c.b16 %v1542, %v1539
        %v1555 = vpack.c.b16 %v1543, %v1540
        %v1556 = vpack.c.b16 %v1544, %v1541
        %v1601 = vunpack.c.l.b16 %v1117
        %v1602 = vunpack.c.l.b16 %v1118
        %v1603 = vunpack.c.l.b16 %v1119
        %v1604 = vunpack.c.l.b16 %v1120
        %v1605 = vunpack.c.l.b16 %v1121
        %v1606 = vunpack.c.l.b16 %v1122
        %v1607 = vunpack.c.l.b16 %v1123
        %v1608 = vunpack.c.l.b16 %v1124
        %v1609 = vunpack.c.l.b16 %v1125
        %v1610 = vunpack.c.l.b16 %v1126
        %v1611 = vunpack.c.l.b16 %v1127
        %v1612 = vunpack.c.l.b16 %v1128
        %v1613 = vunpack.c.l.b16 %v1129
        %v1614 = vunpack.c.l.b16 %v1130
        %v1615 = vunpack.c.l.b16 %v1131
        %v1616 = vunpack.c.l.b16 %v1132
        %v1617 = vunpack.c.l.b16 %v1133
        %v1618 = vunpack.c.l.b16 %v1134
        %v1619 = vunpack.c.l.b16 %v1135
        %v1620 = vunpack.c.l.b16 %v1136
        %v1621 = vunpack.c.l.b16 %v1137
        %v1622 = vunpack.c.l.b16 %v1138
        %v1623 = vunpack.c.l.b16 %v1139
        %v1624 = vunpack.c.l.b16 %v1140
        %v1625 = vunpack.c.l.b16 %v1141
        %v1626 = vunpack.c.l.b16 %v1142
        %v1627 = vunpack.c.l.b16 %v1143
        %v1628 = vunpack.c.l.b16 %v1144
        %v1629 = vunpack.c.l.b16 %v1145
        %v1630 = vunpack.c.l.b16 %v1146
        %v1631 = vunpack.c.l.b16 %v1147
        %v1632 = vunpack.c.l.b16 %v1148
        %v1633 = vunpack.c.l.b16 %v1149
        %v1634 = vunpack.c.l.b16 %v1150
        %v1635 = vunpack.c.l.b16 %v1151
        %v1636 = vunpack.c.l.b16 %v1152
        %v1637 = vpack.c.b16 %v1602, %v1601
        %v1638 = vpack.c.b16 %v1604, %v1603
        %v1639 = vpack.c.b16 %v1606, %v1605
        %v1640 = vpack.c.b16 %v1608, %v1607
        %v1641 = vpack.c.b16 %v1610, %v1609
        %v1642 = vpack.c.b16 %v1612, %v1611
        %v1643 = vpack.c.b16 %v1614, %v1613
        %v1644 = vpack.c.b16 %v1616, %v1615
        %v1645 = vpack.c.b16 %v1618, %v1617
        %v1646 = vpack.c.b16 %v1620, %v1619
        %v1647 = vpack.c.b16 %v1622, %v1621
        %v1648 = vpack.c.b16 %v1624, %v1623
        %v1649 = vpack.c.b16 %v1626, %v1625
        %v1650 = vpack.c.b16 %v1628, %v1627
        %v1651 = vpack.c.b16 %v1630, %v1629
        %v1652 = vpack.c.b16 %v1632, %v1631
        %v1653 = vpack.c.b16 %v1634, %v1633
        %v1654 = vpack.c.b16 %v1636, %v1635
        %v1674 = vsel %vm945, %v1547, 0
        %v1677 = vsel %vm945, %v1550, 0
        %v1680 = vsel %vm945, %v1553, 0
        %v1683 = vsel %vm945, %v1556, 0
        %1685 = vmatpush.bf16.msra.mxu0 %v1644
        %1686 = vmatpush.bf16.msra.mxu0 %v1643
        %1687 = vmatpush.bf16.msra.mxu0 %v1642
        %1688 = vmatpush.bf16.msra.mxu0 %v1641
        %1689 = vmatpush.bf16.msra.mxu0 %v1640
        %1690 = vmatpush.bf16.msra.mxu0 %v1639
        %1691 = vmatpush.bf16.msra.mxu0 %v1638
        %1692 = vmatpush.bf16.msra.mxu0 %v1637
        %1693 = vmatmul.bf16.gmra.mxu0 %v1545
        %v1694 = vpop.f32.mrf.mxu0
        %v1695 = vadd.f32 %v1503, %v1694
        %v1696 = vpop.f32.mrf.mxu0
        %v1697 = vadd.f32 %v1503, %v1696
        %1698 = vmatmul.bf16.gmra.mxu0 %v1548
        %v1699 = vpop.f32.mrf.mxu0
        %v1700 = vadd.f32 %v1503, %v1699
        %v1701 = vpop.f32.mrf.mxu0
        %v1702 = vadd.f32 %v1503, %v1701
        %1703 = vmatmul.bf16.gmra.mxu0 %v1551
        %v1704 = vpop.f32.mrf.mxu0
        %v1705 = vadd.f32 %v1503, %v1704
        %v1706 = vpop.f32.mrf.mxu0
        %v1707 = vadd.f32 %v1503, %v1706
        %1708 = vmatmul.bf16.gmra.mxu0 %v1554
        %v1709 = vpop.f32.mrf.mxu0
        %v1710 = vadd.f32 %v1503, %v1709
        %v1711 = vpop.f32.mrf.mxu0
        %v1712 = vadd.f32 %v1503, %v1711
        %1713 = vdwg.mxu0
        %1714 = vmatpush.bf16.msra.mxu0 %v1652
        %1715 = vmatpush.bf16.msra.mxu0 %v1651
        %1716 = vmatpush.bf16.msra.mxu0 %v1650
        %1717 = vmatpush.bf16.msra.mxu0 %v1649
        %1718 = vmatpush.bf16.msra.mxu0 %v1648
        %1719 = vmatpush.bf16.msra.mxu0 %v1647
        %1720 = vmatpush.bf16.msra.mxu0 %v1646
        %1721 = vmatpush.bf16.msra.mxu0 %v1645
        %1722 = vmatmul.bf16.gmra.mxu0 %v1546
        %v1723 = vpop.f32.mrf.mxu0
        %v1724 = vadd.f32 %v1695, %v1723
        %v1725 = vpop.f32.mrf.mxu0
        %v1726 = vadd.f32 %v1697, %v1725
        %1727 = vmatmul.bf16.gmra.mxu0 %v1549
        %v1728 = vpop.f32.mrf.mxu0
        %v1729 = vadd.f32 %v1700, %v1728
        %v1730 = vpop.f32.mrf.mxu0
        %v1731 = vadd.f32 %v1702, %v1730
        %1732 = vmatmul.bf16.gmra.mxu0 %v1552
        %v1733 = vpop.f32.mrf.mxu0
        %v1734 = vadd.f32 %v1705, %v1733
        %v1735 = vpop.f32.mrf.mxu0
        %v1736 = vadd.f32 %v1707, %v1735
        %1737 = vmatmul.bf16.gmra.mxu0 %v1555
        %v1738 = vpop.f32.mrf.mxu0
        %v1739 = vadd.f32 %v1710, %v1738
        %v1740 = vpop.f32.mrf.mxu0
        %v1741 = vadd.f32 %v1712, %v1740
        %1742 = vdwg.mxu0
        %1743 = vmatpush.bf16.msra.mxu0 0
        %1744 = vmatpush.bf16.msra.mxu0 0
        %1745 = vmatpush.bf16.msra.mxu0 0
        %1746 = vmatpush.bf16.msra.mxu0 0
        %1747 = vmatpush.bf16.msra.mxu0 0
        %1748 = vmatpush.bf16.msra.mxu0 0
        %1749 = vmatpush.bf16.msra.mxu0 %v1654
        %1750 = vmatpush.bf16.msra.mxu0 %v1653
        %1751 = vmatmul.bf16.gmra.mxu0 %v1674
        %v1752 = vpop.f32.mrf.mxu0
        %v1753 = vadd.f32 %v1724, %v1752
        %v1754 = vpop.f32.mrf.mxu0
        %v1755 = vadd.f32 %v1726, %v1754
        %1756 = vmatmul.bf16.gmra.mxu0 %v1677
        %v1757 = vpop.f32.mrf.mxu0
        %v1758 = vadd.f32 %v1729, %v1757
        %v1759 = vpop.f32.mrf.mxu0
        %v1760 = vadd.f32 %v1731, %v1759
        %1761 = vmatmul.bf16.gmra.mxu0 %v1680
        %v1762 = vpop.f32.mrf.mxu0
        %v1763 = vadd.f32 %v1734, %v1762
        %v1764 = vpop.f32.mrf.mxu0
        %v1765 = vadd.f32 %v1736, %v1764
        %1766 = vmatmul.bf16.gmra.mxu0 %v1683
        %v1767 = vpop.f32.mrf.mxu0
        %v1768 = vadd.f32 %v1739, %v1767
        %v1769 = vpop.f32.mrf.mxu0
        %v1770 = vadd.f32 %v1741, %v1769
        %1771 = vdwg.mxu0
        %v1772 = vmax.f32 %v1753, 0.0
        %v1773 = vmax.f32 %v1755, 0.0
        %v1774 = vmax.f32 %v1758, 0.0
        %v1775 = vmax.f32 %v1760, 0.0
        %v1776 = vmax.f32 %v1763, 0.0
        %v1777 = vmax.f32 %v1765, 0.0
        %v1778 = vmax.f32 %v1768, 0.0
        %v1779 = vmax.f32 %v1770, 0.0
        %v1788 = vrot.slane %v1773, 1
        %v1789 = vrot.slane %v1772, 1
        %v1790 = vrot.slane %v1774, 1
        %v1791 = vrot.slane %v1775, 1
        %v1792 = vrot.slane %v1776, 1
        %v1793 = vrot.slane %v1777, 1
        %v1794 = vrot.slane %v1778, 1
        %v1795 = vrot.slane %v1779, 1
        %v1804 = vrot.slane %v1773, 7
        %v1805 = vrot.slane %v1772, 7
        %v1806 = vrot.slane %v1774, 7
        %v1807 = vrot.slane %v1775, 7
        %v1808 = vrot.slane %v1776, 7
        %v1809 = vrot.slane %v1777, 7
        %v1810 = vrot.slane %v1778, 7
        %v1811 = vrot.slane %v1779, 7
        %v1820 = vrot.slane %v1773, 5
        %v1821 = vrot.slane %v1772, 5
        %v1822 = vrot.slane %v1774, 5
        %v1823 = vrot.slane %v1775, 5
        %v1824 = vrot.slane %v1776, 5
        %v1825 = vrot.slane %v1777, 5
        %v1826 = vrot.slane %v1778, 5
        %v1827 = vrot.slane %v1779, 5
        %v1836 = vsel %vm366, %v1788, %v1804
        %v1837 = vsel %vm366, %v1789, %v1805
        %v1838 = vsel %vm366, %v1790, %v1806
        %v1839 = vsel %vm366, %v1791, %v1807
        %v1840 = vsel %vm366, %v1792, %v1808
        %v1841 = vsel %vm366, %v1793, %v1809
        %v1842 = vsel %vm366, %v1794, %v1810
        %v1843 = vsel %vm366, %v1795, %v1811
        %v1844 = vsel %vm366, %v1804, %v1820
        %v1845 = vsel %vm366, %v1805, %v1821
        %v1846 = vsel %vm366, %v1806, %v1822
        %v1847 = vsel %vm366, %v1807, %v1823
        %v1848 = vsel %vm366, %v1808, %v1824
        %v1849 = vsel %vm366, %v1809, %v1825
        %v1850 = vsel %vm366, %v1810, %v1826
        %v1851 = vsel %vm366, %v1811, %v1827
        %v1852 = vld [vmem:[%s5] sm:$0xf]
        %v1853 = vld [vmem:[%s5 + $0x4] sm:$0xf]
        %v1854 = vld [vmem:[%s5 + $0x8] sm:$0xf]
        %v1855 = vld [vmem:[%s5 + $0xc] sm:$0xf]
        %v1856 = vld [vmem:[%s5 + $0x10] sm:$0xf]
        %v1857 = vld [vmem:[%s5 + $0x14] sm:$0xf]
        %v1858 = vld [vmem:[%s5 + $0x18] sm:$0xf]
        %v1859 = vld [vmem:[%s5 + $0x1c] sm:$0xf]
        %v1860 = vld [vmem:[%s5 + $0x20] sm:$0xf]
        %v1861 = vld [vmem:[%s6] sm:$0x1]
        %v1862 = vpack.c.bf16 %v1836, %v1836
        %v1863 = vpack.c.bf16 %v1837, %v1837
        %v1864 = vpack.c.bf16 %v1838, %v1838
        %v1865 = vpack.c.bf16 %v1839, %v1839
        %v1866 = vpack.c.bf16 %v1840, %v1840
        %v1867 = vpack.c.bf16 %v1841, %v1841
        %v1868 = vpack.c.bf16 %v1842, %v1842
        %vm1869 = vcmask 60416
        %1870 = vst.msk [vmem:[#allocation2] sm:$0xf] %vm1869, %v1862
        %1871 = vst.msk [vmem:[#allocation2 + $0xc] sm:$0xf] %vm1869, %v1863
        %1872 = vst.msk [vmem:[#allocation2 + $0x18] sm:$0xf] %vm1869, %v1862
        %1873 = vst.msk [vmem:[#allocation2 + $0x24] sm:$0xf] %vm1869, %v1864
        %1874 = vst.msk [vmem:[#allocation2 + $0x30] sm:$0xf] %vm1869, %v1865
        %1875 = vst.msk [vmem:[#allocation2 + $0x3c] sm:$0xf] %vm1869, %v1866
        %1876 = vst.msk [vmem:[#allocation2 + $0x48] sm:$0xf] %vm1869, %v1867
        %1877 = vst.msk [vmem:[#allocation2 + $0x54] sm:$0xf] %vm1869, %v1868
        %v1892 = vrot.slane %v1836, 1
        %v1893 = vrot.slane %v1844, 1
        %v1894 = vsel %vm450, %v1892, %v1893
        %v1895 = vrot.slane %v1837, 1
        %v1896 = vrot.slane %v1845, 1
        %v1897 = vsel %vm450, %v1895, %v1896
        %v1898 = vrot.slane %v1838, 1
        %v1899 = vrot.slane %v1846, 1
        %v1900 = vsel %vm450, %v1898, %v1899
        %v1901 = vrot.slane %v1839, 1
        %v1902 = vrot.slane %v1847, 1
        %v1903 = vsel %vm450, %v1901, %v1902
        %v1904 = vrot.slane %v1840, 1
        %v1905 = vrot.slane %v1848, 1
        %v1906 = vsel %vm450, %v1904, %v1905
        %v1907 = vrot.slane %v1841, 1
        %v1908 = vrot.slane %v1849, 1
        %v1909 = vsel %vm450, %v1907, %v1908
        %v1910 = vrot.slane %v1842, 1
        %v1911 = vrot.slane %v1850, 1
        %v1912 = vsel %vm450, %v1910, %v1911
        %v1920 = vpack.c.bf16 %v1894, %v1894
        %v1921 = vpack.c.bf16 %v1897, %v1897
        %v1922 = vpack.c.bf16 %v1900, %v1900
        %v1923 = vpack.c.bf16 %v1903, %v1903
        %v1924 = vpack.c.bf16 %v1906, %v1906
        %v1925 = vpack.c.bf16 %v1909, %v1909
        %v1926 = vpack.c.bf16 %v1912, %v1912
        %1934 = vrot.lane.b32.xlu0 %v1920, 8
        %v1935 = vpop.permute.xlu0 %1934
        %1936 = vrot.lane.b32.xlu0 %v1921, 8
        %v1937 = vpop.permute.xlu0 %1936
        %1938 = vrot.lane.b32.xlu0 %v1922, 8
        %v1939 = vpop.permute.xlu0 %1938
        %1940 = vrot.lane.b32.xlu0 %v1923, 8
        %v1941 = vpop.permute.xlu0 %1940
        %1942 = vrot.lane.b32.xlu0 %v1924, 8
        %v1943 = vpop.permute.xlu0 %1942
        %1944 = vrot.lane.b32.xlu0 %v1925, 8
        %v1945 = vpop.permute.xlu0 %1944
        %1946 = vrot.lane.b32.xlu0 %v1926, 8
        %v1947 = vpop.permute.xlu0 %1946
        %vm1955 = vcmask 126016
        %1956 = vst.msk [vmem:[#allocation2] sm:$0xf] %vm1955, %v1935
        %1957 = vst.msk [vmem:[#allocation2 + $0xc] sm:$0xf] %vm1955, %v1937
        %1958 = vst.msk [vmem:[#allocation2 + $0x18] sm:$0xf] %vm1955, %v1935
        %1959 = vst.msk [vmem:[#allocation2 + $0x24] sm:$0xf] %vm1955, %v1939
        %1960 = vst.msk [vmem:[#allocation2 + $0x30] sm:$0xf] %vm1955, %v1941
        %1961 = vst.msk [vmem:[#allocation2 + $0x3c] sm:$0xf] %vm1955, %v1943
        %1962 = vst.msk [vmem:[#allocation2 + $0x48] sm:$0xf] %vm1955, %v1945
        %1963 = vst.msk [vmem:[#allocation2 + $0x54] sm:$0xf] %vm1955, %v1947
        %v1964 = vrot.slane %v1836, 2
        %v1965 = vrot.slane %v1844, 2
        %v1966 = vsel %vm523, %v1964, %v1965
        %v1967 = vrot.slane %v1837, 2
        %v1968 = vrot.slane %v1845, 2
        %v1969 = vsel %vm523, %v1967, %v1968
        %v1970 = vrot.slane %v1838, 2
        %v1971 = vrot.slane %v1846, 2
        %v1972 = vsel %vm523, %v1970, %v1971
        %v1973 = vrot.slane %v1839, 2
        %v1974 = vrot.slane %v1847, 2
        %v1975 = vsel %vm523, %v1973, %v1974
        %v1976 = vrot.slane %v1840, 2
        %v1977 = vrot.slane %v1848, 2
        %v1978 = vsel %vm523, %v1976, %v1977
        %v1979 = vrot.slane %v1841, 2
        %v1980 = vrot.slane %v1849, 2
        %v1981 = vsel %vm523, %v1979, %v1980
        %v1982 = vrot.slane %v1842, 2
        %v1983 = vrot.slane %v1850, 2
        %v1984 = vsel %vm523, %v1982, %v1983
        %v1992 = vpack.c.bf16 %v1966, %v1966
        %v1993 = vpack.c.bf16 %v1969, %v1969
        %v1994 = vpack.c.bf16 %v1972, %v1972
        %v1995 = vpack.c.bf16 %v1975, %v1975
        %v1996 = vpack.c.bf16 %v1978, %v1978
        %v1997 = vpack.c.bf16 %v1981, %v1981
        %v1998 = vpack.c.bf16 %v1984, %v1984
        %2006 = vrot.lane.b32.xlu0 %v1992, 16
        %v2007 = vpop.permute.xlu0 %2006
        %2008 = vrot.lane.b32.xlu0 %v1993, 16
        %v2009 = vpop.permute.xlu0 %2008
        %2010 = vrot.lane.b32.xlu0 %v1994, 16
        %v2011 = vpop.permute.xlu0 %2010
        %2012 = vrot.lane.b32.xlu0 %v1995, 16
        %v2013 = vpop.permute.xlu0 %2012
        %2014 = vrot.lane.b32.xlu0 %v1996, 16
        %v2015 = vpop.permute.xlu0 %2014
        %2016 = vrot.lane.b32.xlu0 %v1997, 16
        %v2017 = vpop.permute.xlu0 %2016
        %2018 = vrot.lane.b32.xlu0 %v1998, 16
        %v2019 = vpop.permute.xlu0 %2018
        %vm2027 = vcmask 191616
        %2028 = vst.msk [vmem:[#allocation2] sm:$0xf] %vm2027, %v2007
        %2029 = vst.msk [vmem:[#allocation2 + $0xc] sm:$0xf] %vm2027, %v2009
        %2030 = vst.msk [vmem:[#allocation2 + $0x18] sm:$0xf] %vm2027, %v2007
        %2031 = vst.msk [vmem:[#allocation2 + $0x24] sm:$0xf] %vm2027, %v2011
        %2032 = vst.msk [vmem:[#allocation2 + $0x30] sm:$0xf] %vm2027, %v2013
        %2033 = vst.msk [vmem:[#allocation2 + $0x3c] sm:$0xf] %vm2027, %v2015
        %2034 = vst.msk [vmem:[#allocation2 + $0x48] sm:$0xf] %vm2027, %v2017
        %2035 = vst.msk [vmem:[#allocation2 + $0x54] sm:$0xf] %vm2027, %v2019
        %v2036 = vpack.c.bf16 %v1843, %v1843
        %2045 = vrot.lane.b32.xlu0 %v1863, 24
        %v2046 = vpop.permute.xlu0 %2045
        %2047 = vrot.lane.b32.xlu0 %v1862, 24
        %v2048 = vpop.permute.xlu0 %2047
        %2049 = vrot.lane.b32.xlu0 %v1864, 24
        %v2050 = vpop.permute.xlu0 %2049
        %2051 = vrot.lane.b32.xlu0 %v1865, 24
        %v2052 = vpop.permute.xlu0 %2051
        %2053 = vrot.lane.b32.xlu0 %v1866, 24
        %v2054 = vpop.permute.xlu0 %2053
        %2055 = vrot.lane.b32.xlu0 %v1867, 24
        %v2056 = vpop.permute.xlu0 %2055
        %2057 = vrot.lane.b32.xlu0 %v1868, 24
        %v2058 = vpop.permute.xlu0 %2057
        %2059 = vrot.lane.b32.xlu0 %v2036, 24
        %v2060 = vpop.permute.xlu0 %2059
        %vm2069 = vcmask 257216
        %2070 = vst.msk [vmem:[#allocation2] sm:$0xf] %vm2069, %v2046
        %2071 = vst.msk [vmem:[#allocation2 + $0xc] sm:$0xf] %vm2069, %v2048
        %2072 = vst.msk [vmem:[#allocation2 + $0x18] sm:$0xf] %vm2069, %v2050
        %2073 = vst.msk [vmem:[#allocation2 + $0x24] sm:$0xf] %vm2069, %v2052
        %2074 = vst.msk [vmem:[#allocation2 + $0x30] sm:$0xf] %vm2069, %v2054
        %2075 = vst.msk [vmem:[#allocation2 + $0x3c] sm:$0xf] %vm2069, %v2056
        %2076 = vst.msk [vmem:[#allocation2 + $0x48] sm:$0xf] %vm2069, %v2058
        %2077 = vst.msk [vmem:[#allocation2 + $0x54] sm:$0xf] %vm2069, %v2060
        %v2080 = vrot.slane %v1843, 1
        %v2081 = vrot.slane %v1851, 1
        %v2082 = vsel %vm450, %v2080, %v2081
        %v2084 = vpack.c.bf16 %v2082, %v2082
        %2086 = vrot.lane.b32.xlu0 %v1921, 32
        %v2087 = vpop.permute.xlu0 %2086
        %2088 = vrot.lane.b32.xlu0 %v1920, 32
        %v2089 = vpop.permute.xlu0 %2088
        %2090 = vrot.lane.b32.xlu0 %v1922, 32
        %v2091 = vpop.permute.xlu0 %2090
        %2092 = vrot.lane.b32.xlu0 %v1923, 32
        %v2093 = vpop.permute.xlu0 %2092
        %2094 = vrot.lane.b32.xlu0 %v1924, 32
        %v2095 = vpop.permute.xlu0 %2094
        %2096 = vrot.lane.b32.xlu0 %v1925, 32
        %v2097 = vpop.permute.xlu0 %2096
        %2098 = vrot.lane.b32.xlu0 %v1926, 32
        %v2099 = vpop.permute.xlu0 %2098
        %2100 = vrot.lane.b32.xlu0 %v2084, 32
        %v2101 = vpop.permute.xlu0 %2100
        %vm2110 = vcmask 322816
        %2111 = vst.msk [vmem:[#allocation2] sm:$0xf] %vm2110, %v2087
        %2112 = vst.msk [vmem:[#allocation2 + $0xc] sm:$0xf] %vm2110, %v2089
        %2113 = vst.msk [vmem:[#allocation2 + $0x18] sm:$0xf] %vm2110, %v2091
        %2114 = vst.msk [vmem:[#allocation2 + $0x24] sm:$0xf] %vm2110, %v2093
        %2115 = vst.msk [vmem:[#allocation2 + $0x30] sm:$0xf] %vm2110, %v2095
        %2116 = vst.msk [vmem:[#allocation2 + $0x3c] sm:$0xf] %vm2110, %v2097
        %2117 = vst.msk [vmem:[#allocation2 + $0x48] sm:$0xf] %vm2110, %v2099
        %2118 = vst.msk [vmem:[#allocation2 + $0x54] sm:$0xf] %vm2110, %v2101
        %v2119 = vrot.slane %v1843, 2
        %v2120 = vrot.slane %v1851, 2
        %v2121 = vsel %vm523, %v2119, %v2120
        %v2123 = vpack.c.bf16 %v2121, %v2121
        %2125 = vrot.lane.b32.xlu0 %v1993, 40
        %v2126 = vpop.permute.xlu0 %2125
        %2127 = vrot.lane.b32.xlu0 %v1992, 40
        %v2128 = vpop.permute.xlu0 %2127
        %2129 = vrot.lane.b32.xlu0 %v1994, 40
        %v2130 = vpop.permute.xlu0 %2129
        %2131 = vrot.lane.b32.xlu0 %v1995, 40
        %v2132 = vpop.permute.xlu0 %2131
        %2133 = vrot.lane.b32.xlu0 %v1996, 40
        %v2134 = vpop.permute.xlu0 %2133
        %2135 = vrot.lane.b32.xlu0 %v1997, 40
        %v2136 = vpop.permute.xlu0 %2135
        %2137 = vrot.lane.b32.xlu0 %v1998, 40
        %v2138 = vpop.permute.xlu0 %2137
        %2139 = vrot.lane.b32.xlu0 %v2123, 40
        %v2140 = vpop.permute.xlu0 %2139
        %vm2149 = vcmask 388416
        %2150 = vst.msk [vmem:[#allocation2] sm:$0xf] %vm2149, %v2126
        %2151 = vst.msk [vmem:[#allocation2 + $0xc] sm:$0xf] %vm2149, %v2128
        %2152 = vst.msk [vmem:[#allocation2 + $0x18] sm:$0xf] %vm2149, %v2130
        %2153 = vst.msk [vmem:[#allocation2 + $0x24] sm:$0xf] %vm2149, %v2132
        %2154 = vst.msk [vmem:[#allocation2 + $0x30] sm:$0xf] %vm2149, %v2134
        %2155 = vst.msk [vmem:[#allocation2 + $0x3c] sm:$0xf] %vm2149, %v2136
        %2156 = vst.msk [vmem:[#allocation2 + $0x48] sm:$0xf] %vm2149, %v2138
        %2157 = vst.msk [vmem:[#allocation2 + $0x54] sm:$0xf] %vm2149, %v2140
        %2158 = vrot.lane.b32.xlu0 %v1862, 48
        %v2159 = vpop.permute.xlu0 %2158
        %2160 = vrot.lane.b32.xlu0 %v1864, 48
        %v2161 = vpop.permute.xlu0 %2160
        %2162 = vrot.lane.b32.xlu0 %v1865, 48
        %v2163 = vpop.permute.xlu0 %2162
        %2164 = vrot.lane.b32.xlu0 %v1866, 48
        %v2165 = vpop.permute.xlu0 %2164
        %2166 = vrot.lane.b32.xlu0 %v1867, 48
        %v2167 = vpop.permute.xlu0 %2166
        %2168 = vrot.lane.b32.xlu0 %v1868, 48
        %v2169 = vpop.permute.xlu0 %2168
        %2170 = vrot.lane.b32.xlu0 %v2036, 48
        %v2171 = vpop.permute.xlu0 %2170
        %vm2179 = vcmask 454016
        %2180 = vst.msk [vmem:[#allocation2] sm:$0xf] %vm2179, %v2159
        %2181 = vst.msk [vmem:[#allocation2 + $0xc] sm:$0xf] %vm2179, %v2161
        %2182 = vst.msk [vmem:[#allocation2 + $0x18] sm:$0xf] %vm2179, %v2163
        %2183 = vst.msk [vmem:[#allocation2 + $0x24] sm:$0xf] %vm2179, %v2165
        %2184 = vst.msk [vmem:[#allocation2 + $0x30] sm:$0xf] %vm2179, %v2167
        %2185 = vst.msk [vmem:[#allocation2 + $0x3c] sm:$0xf] %vm2179, %v2169
        %2186 = vst.msk [vmem:[#allocation2 + $0x48] sm:$0xf] %vm2179, %v2171
        %2187 = vst.msk [vmem:[#allocation2 + $0x54] sm:$0xf] %vm2179, %v2169
        %2188 = vrot.lane.b32.xlu0 %v1920, 56
        %v2189 = vpop.permute.xlu0 %2188
        %2190 = vrot.lane.b32.xlu0 %v1922, 56
        %v2191 = vpop.permute.xlu0 %2190
        %2192 = vrot.lane.b32.xlu0 %v1923, 56
        %v2193 = vpop.permute.xlu0 %2192
        %2194 = vrot.lane.b32.xlu0 %v1924, 56
        %v2195 = vpop.permute.xlu0 %2194
        %2196 = vrot.lane.b32.xlu0 %v1925, 56
        %v2197 = vpop.permute.xlu0 %2196
        %2198 = vrot.lane.b32.xlu0 %v1926, 56
        %v2199 = vpop.permute.xlu0 %2198
        %2200 = vrot.lane.b32.xlu0 %v2084, 56
        %v2201 = vpop.permute.xlu0 %2200
        %vm2209 = vcmask 519616
        %2210 = vst.msk [vmem:[#allocation2] sm:$0xf] %vm2209, %v2189
        %2211 = vst.msk [vmem:[#allocation2 + $0xc] sm:$0xf] %vm2209, %v2191
        %2212 = vst.msk [vmem:[#allocation2 + $0x18] sm:$0xf] %vm2209, %v2193
        %2213 = vst.msk [vmem:[#allocation2 + $0x24] sm:$0xf] %vm2209, %v2195
        %2214 = vst.msk [vmem:[#allocation2 + $0x30] sm:$0xf] %vm2209, %v2197
        %2215 = vst.msk [vmem:[#allocation2 + $0x3c] sm:$0xf] %vm2209, %v2199
        %2216 = vst.msk [vmem:[#allocation2 + $0x48] sm:$0xf] %vm2209, %v2201
        %2217 = vst.msk [vmem:[#allocation2 + $0x54] sm:$0xf] %vm2209, %v2199
        %2218 = vrot.lane.b32.xlu0 %v1992, 64
        %v2219 = vpop.permute.xlu0 %2218
        %2220 = vrot.lane.b32.xlu0 %v1994, 64
        %v2221 = vpop.permute.xlu0 %2220
        %2222 = vrot.lane.b32.xlu0 %v1995, 64
        %v2223 = vpop.permute.xlu0 %2222
        %2224 = vrot.lane.b32.xlu0 %v1996, 64
        %v2225 = vpop.permute.xlu0 %2224
        %2226 = vrot.lane.b32.xlu0 %v1997, 64
        %v2227 = vpop.permute.xlu0 %2226
        %2228 = vrot.lane.b32.xlu0 %v1998, 64
        %v2229 = vpop.permute.xlu0 %2228
        %2230 = vrot.lane.b32.xlu0 %v2123, 64
        %v2231 = vpop.permute.xlu0 %2230
        %vm2239 = vcmask 585216
        %2240 = vst.msk [vmem:[#allocation2] sm:$0xf] %vm2239, %v2219
        %2241 = vst.msk [vmem:[#allocation2 + $0xc] sm:$0xf] %vm2239, %v2221
        %2242 = vst.msk [vmem:[#allocation2 + $0x18] sm:$0xf] %vm2239, %v2223
        %2243 = vst.msk [vmem:[#allocation2 + $0x24] sm:$0xf] %vm2239, %v2225
        %2244 = vst.msk [vmem:[#allocation2 + $0x30] sm:$0xf] %vm2239, %v2227
        %2245 = vst.msk [vmem:[#allocation2 + $0x3c] sm:$0xf] %vm2239, %v2229
        %2246 = vst.msk [vmem:[#allocation2 + $0x48] sm:$0xf] %vm2239, %v2231
        %2247 = vst.msk [vmem:[#allocation2 + $0x54] sm:$0xf] %vm2239, %v2229
        %v2248 = vld [vmem:[#allocation2] sm:$0xf]
        %v2249 = vld [vmem:[#allocation2 + $0xc] sm:$0xf]
        %v2250 = vld [vmem:[#allocation2 + $0x18] sm:$0xf]
        %v2251 = vld [vmem:[#allocation2 + $0x24] sm:$0xf]
        %v2252 = vld [vmem:[#allocation2 + $0x30] sm:$0xf]
        %v2253 = vld [vmem:[#allocation2 + $0x3c] sm:$0xf]
        %v2254 = vld [vmem:[#allocation2 + $0x48] sm:$0xf]
        %v2255 = vld [vmem:[#allocation2 + $0x54] sm:$0xf]
        %v2257 = vperm.slane %v1861, 0
        %v2267 = vunpack.c.l.b16 %v2248
        %v2268 = vunpack.c.l.b16 %v2249
        %v2269 = vunpack.c.l.b16 %v2250
        %v2270 = vunpack.c.l.b16 %v2251
        %v2271 = vunpack.c.l.b16 %v2252
        %v2272 = vunpack.c.l.b16 %v2253
        %v2273 = vunpack.c.l.b16 %v2254
        %v2274 = vunpack.c.l.b16 %v2255
        %v2275 = vpack.c.b16 %v2268, %v2267
        %v2276 = vpack.c.b16 %v2270, %v2269
        %v2277 = vpack.c.b16 %v2272, %v2271
        %v2278 = vpack.c.b16 %v2274, %v2273
        %v2288 = vunpack.c.l.b16 %v1852
        %v2289 = vunpack.c.l.b16 %v1853
        %v2290 = vunpack.c.l.b16 %v1854
        %v2291 = vunpack.c.l.b16 %v1855
        %v2292 = vunpack.c.l.b16 %v1856
        %v2293 = vunpack.c.l.b16 %v1857
        %v2294 = vunpack.c.l.b16 %v1858
        %v2295 = vunpack.c.l.b16 %v1859
        %v2296 = vunpack.c.l.b16 %v1860
        %v2297 = vpack.c.b16 %v2289, %v2288
        %v2298 = vpack.c.b16 %v2291, %v2290
        %v2299 = vpack.c.b16 %v2293, %v2292
        %v2300 = vpack.c.b16 %v2295, %v2294
        %v2301 = vpack.c.b16 %v2296, %v2296
        %vm2306 = vcmask 588800
        %v2308 = vsel %vm2306, %v2275, 0
        %v2311 = vsel %vm2306, %v2276, 0
        %v2314 = vsel %vm2306, %v2277, 0
        %v2317 = vsel %vm2306, %v2278, 0
        %vm2319 = vcmask 1043456
        %v2321 = vsel %vm2319, %v2301, 0
        %2323 = vmatpush.bf16.msra.mxu0 0
        %2324 = vmatpush.bf16.msra.mxu0 0
        %2325 = vmatpush.bf16.msra.mxu0 0
        %2326 = vmatpush.bf16.msra.mxu0 %v2321
        %2327 = vmatpush.bf16.msra.mxu0 %v2300
        %2328 = vmatpush.bf16.msra.mxu0 %v2299
        %2329 = vmatpush.bf16.msra.mxu0 %v2298
        %2330 = vmatpush.bf16.msra.mxu0 %v2297
        %2331 = vmatmul.bf16.gmra.mxu0 %v2308
        %v2332 = vpop.f32.mrf.mxu0
        %v2333 = vadd.f32 %v2257, %v2332
        %v2334 = vpop.f32.mrf.mxu0
        %v2335 = vadd.f32 %v2257, %v2334
        %2336 = vmatmul.bf16.gmra.mxu0 %v2311
        %v2337 = vpop.f32.mrf.mxu0
        %v2338 = vadd.f32 %v2257, %v2337
        %v2339 = vpop.f32.mrf.mxu0
        %v2340 = vadd.f32 %v2257, %v2339
        %2341 = vmatmul.bf16.gmra.mxu0 %v2314
        %v2342 = vpop.f32.mrf.mxu0
        %v2343 = vadd.f32 %v2257, %v2342
        %v2344 = vpop.f32.mrf.mxu0
        %v2345 = vadd.f32 %v2257, %v2344
        %2346 = vmatmul.bf16.gmra.mxu0 %v2317
        %v2347 = vpop.f32.mrf.mxu0
        %v2348 = vadd.f32 %v2257, %v2347
        %v2349 = vpop.f32.mrf.mxu0
        %v2350 = vadd.f32 %v2257, %v2349
        %2351 = vdwg.mxu0
        %v2352 = vxor.u32 %v2333, 2147483648
        %v2353 = vxor.u32 %v2335, 2147483648
        %v2354 = vxor.u32 %v2338, 2147483648
        %v2355 = vxor.u32 %v2340, 2147483648
        %v2356 = vxor.u32 %v2343, 2147483648
        %v2357 = vxor.u32 %v2345, 2147483648
        %v2358 = vxor.u32 %v2348, 2147483648
        %v2359 = vxor.u32 %v2350, 2147483648
        %v2360 = vmul.f32 %v2352, 1.442695
        %v2361 = vpow.pop %v2360
        %v2362 = vmul.f32 %v2353, 1.442695
        %v2363 = vpow.pop %v2362
        %v2364 = vmul.f32 %v2354, 1.442695
        %v2365 = vpow.pop %v2364
        %v2366 = vmul.f32 %v2355, 1.442695
        %v2367 = vpow.pop %v2366
        %v2368 = vmul.f32 %v2356, 1.442695
        %v2369 = vpow.pop %v2368
        %v2370 = vmul.f32 %v2357, 1.442695
        %v2371 = vpow.pop %v2370
        %v2372 = vmul.f32 %v2358, 1.442695
        %v2373 = vpow.pop %v2372
        %v2374 = vmul.f32 %v2359, 1.442695
        %v2375 = vpow.pop %v2374
        %v2376 = vadd.f32 %v2361, 1.0
        %v2377 = vadd.f32 %v2363, 1.0
        %v2378 = vadd.f32 %v2365, 1.0
        %v2379 = vadd.f32 %v2367, 1.0
        %v2380 = vadd.f32 %v2369, 1.0
        %v2381 = vadd.f32 %v2371, 1.0
        %v2382 = vadd.f32 %v2373, 1.0
        %v2383 = vadd.f32 %v2375, 1.0
        %v2384 = vrcp.pop %v2376
        %v2385 = vmul.f32 %v2376, %v2384
        %v2386 = vsub.f32 1.0, %v2385
        %v2387 = vmul.f32 %v2384, %v2386
        %v2388 = vadd.f32 %v2384, %v2387
        %vm2389 = vweird.f32 %v2376
        %vm2390 = vweird.f32 %v2384
        %vm2391 = vmor %vm2389, %vm2390
        %v2392 = vsel %vm2391, %v2384, %v2388
        %v2393 = vand.u32 2147483647, %v2376
        %vm2394 = vcmp.eq.f32.partialorder %v2393, 8.507059e+37
        %v2395 = vand.u32 %v2376, 2147483648
        %v2396 = vor.u32 1.1754944e-38, %v2395
        %v2397 = vsel %vm2394, %v2396, %v2392
        %v2398 = vmul.f32 1.0, %v2397
        %v2399 = vrcp.pop %v2377
        %v2400 = vmul.f32 %v2377, %v2399
        %v2401 = vsub.f32 1.0, %v2400
        %v2402 = vmul.f32 %v2399, %v2401
        %v2403 = vadd.f32 %v2399, %v2402
        %vm2404 = vweird.f32 %v2377
        %vm2405 = vweird.f32 %v2399
        %vm2406 = vmor %vm2404, %vm2405
        %v2407 = vsel %vm2406, %v2399, %v2403
        %v2408 = vand.u32 2147483647, %v2377
        %vm2409 = vcmp.eq.f32.partialorder %v2408, 8.507059e+37
        %v2410 = vand.u32 %v2377, 2147483648
        %v2411 = vor.u32 1.1754944e-38, %v2410
        %v2412 = vsel %vm2409, %v2411, %v2407
        %v2413 = vmul.f32 1.0, %v2412
        %v2414 = vrcp.pop %v2378
        %v2415 = vmul.f32 %v2378, %v2414
        %v2416 = vsub.f32 1.0, %v2415
        %v2417 = vmul.f32 %v2414, %v2416
        %v2418 = vadd.f32 %v2414, %v2417
        %vm2419 = vweird.f32 %v2378
        %vm2420 = vweird.f32 %v2414
        %vm2421 = vmor %vm2419, %vm2420
        %v2422 = vsel %vm2421, %v2414, %v2418
        %v2423 = vand.u32 2147483647, %v2378
        %vm2424 = vcmp.eq.f32.partialorder %v2423, 8.507059e+37
        %v2425 = vand.u32 %v2378, 2147483648
        %v2426 = vor.u32 1.1754944e-38, %v2425
        %v2427 = vsel %vm2424, %v2426, %v2422
        %v2428 = vmul.f32 1.0, %v2427
        %v2429 = vrcp.pop %v2379
        %v2430 = vmul.f32 %v2379, %v2429
        %v2431 = vsub.f32 1.0, %v2430
        %v2432 = vmul.f32 %v2429, %v2431
        %v2433 = vadd.f32 %v2429, %v2432
        %vm2434 = vweird.f32 %v2379
        %vm2435 = vweird.f32 %v2429
        %vm2436 = vmor %vm2434, %vm2435
        %v2437 = vsel %vm2436, %v2429, %v2433
        %v2438 = vand.u32 2147483647, %v2379
        %vm2439 = vcmp.eq.f32.partialorder %v2438, 8.507059e+37
        %v2440 = vand.u32 %v2379, 2147483648
        %v2441 = vor.u32 1.1754944e-38, %v2440
        %v2442 = vsel %vm2439, %v2441, %v2437
        %v2443 = vmul.f32 1.0, %v2442
        %v2444 = vrcp.pop %v2380
        %v2445 = vmul.f32 %v2380, %v2444
        %v2446 = vsub.f32 1.0, %v2445
        %v2447 = vmul.f32 %v2444, %v2446
        %v2448 = vadd.f32 %v2444, %v2447
        %vm2449 = vweird.f32 %v2380
        %vm2450 = vweird.f32 %v2444
        %vm2451 = vmor %vm2449, %vm2450
        %v2452 = vsel %vm2451, %v2444, %v2448
        %v2453 = vand.u32 2147483647, %v2380
        %vm2454 = vcmp.eq.f32.partialorder %v2453, 8.507059e+37
        %v2455 = vand.u32 %v2380, 2147483648
        %v2456 = vor.u32 1.1754944e-38, %v2455
        %v2457 = vsel %vm2454, %v2456, %v2452
        %v2458 = vmul.f32 1.0, %v2457
        %v2459 = vrcp.pop %v2381
        %v2460 = vmul.f32 %v2381, %v2459
        %v2461 = vsub.f32 1.0, %v2460
        %v2462 = vmul.f32 %v2459, %v2461
        %v2463 = vadd.f32 %v2459, %v2462
        %vm2464 = vweird.f32 %v2381
        %vm2465 = vweird.f32 %v2459
        %vm2466 = vmor %vm2464, %vm2465
        %v2467 = vsel %vm2466, %v2459, %v2463
        %v2468 = vand.u32 2147483647, %v2381
        %vm2469 = vcmp.eq.f32.partialorder %v2468, 8.507059e+37
        %v2470 = vand.u32 %v2381, 2147483648
        %v2471 = vor.u32 1.1754944e-38, %v2470
        %v2472 = vsel %vm2469, %v2471, %v2467
        %v2473 = vmul.f32 1.0, %v2472
        %v2474 = vrcp.pop %v2382
        %v2475 = vmul.f32 %v2382, %v2474
        %v2476 = vsub.f32 1.0, %v2475
        %v2477 = vmul.f32 %v2474, %v2476
        %v2478 = vadd.f32 %v2474, %v2477
        %vm2479 = vweird.f32 %v2382
        %vm2480 = vweird.f32 %v2474
        %vm2481 = vmor %vm2479, %vm2480
        %v2482 = vsel %vm2481, %v2474, %v2478
        %v2483 = vand.u32 2147483647, %v2382
        %vm2484 = vcmp.eq.f32.partialorder %v2483, 8.507059e+37
        %v2485 = vand.u32 %v2382, 2147483648
        %v2486 = vor.u32 1.1754944e-38, %v2485
        %v2487 = vsel %vm2484, %v2486, %v2482
        %v2488 = vmul.f32 1.0, %v2487
        %v2489 = vrcp.pop %v2383
        %v2490 = vmul.f32 %v2383, %v2489
        %v2491 = vsub.f32 1.0, %v2490
        %v2492 = vmul.f32 %v2489, %v2491
        %v2493 = vadd.f32 %v2489, %v2492
        %vm2494 = vweird.f32 %v2383
        %vm2495 = vweird.f32 %v2489
        %vm2496 = vmor %vm2494, %vm2495
        %v2497 = vsel %vm2496, %v2489, %v2493
        %v2498 = vand.u32 2147483647, %v2383
        %vm2499 = vcmp.eq.f32.partialorder %v2498, 8.507059e+37
        %v2500 = vand.u32 %v2383, 2147483648
        %v2501 = vor.u32 1.1754944e-38, %v2500
        %v2502 = vsel %vm2499, %v2501, %v2497
        %v2503 = vmul.f32 1.0, %v2502
        %v2504 = vmul.f32 %v2398, %v1026
        %v2505 = vmul.f32 %v2413, %v1028
        %v2506 = vmul.f32 %v2428, %v1031
        %v2507 = vmul.f32 %v2443, %v1033
        %v2508 = vmul.f32 %v2458, %v1036
        %v2509 = vmul.f32 %v2473, %v1038
        %v2510 = vmul.f32 %v2488, %v1041
        %v2511 = vmul.f32 %v2503, %v1043
        %v2512 = vadd.f32 %v2504, %v278
        %v2513 = vadd.f32 %v2505, %v279
        %v2514 = vadd.f32 %v2506, %v280
        %v2515 = vadd.f32 %v2507, %v281
        %v2516 = vadd.f32 %v2508, %v282
        %v2517 = vadd.f32 %v2509, %v283
        %v2518 = vadd.f32 %v2510, %v284
        %v2519 = vadd.f32 %v2511, %v285
        %2520 = vst.msk [vmem:[%s271] sm:$0xff] %vm945, %v2512
        %2521 = vst.msk [vmem:[%s271 + $0x8] sm:$0xff] %vm945, %v2513
        %2522 = vst.msk [vmem:[%s271 + $0x10] sm:$0xff] %vm945, %v2514
        %2523 = vst.msk [vmem:[%s271 + $0x18] sm:$0xff] %vm945, %v2515
        %2524 = vst.msk [vmem:[%s271 + $0x20] sm:$0xff] %vm945, %v2516
        %2525 = vst.msk [vmem:[%s271 + $0x28] sm:$0xff] %vm945, %v2517
        %2526 = vst.msk [vmem:[%s271 + $0x30] sm:$0xff] %vm945, %v2518
        %2527 = vst.msk [vmem:[%s271 + $0x38] sm:$0xff] %vm945, %v2519
        %s2528 = sand.u32 %s181, 1
        %s2529 = scalar_lea.sflag [#allocation4], %s2528
        %s2530 = sand.u32 %s181, 1
        %s2531 = smul.addr %s2530, 64
        %s2532 = scalar_lea.vmem [#allocation3], %s2531
        // Predicated region
        $region49: #{sgblock_forward.1} parent=47 // pred_check
          %p2533 = pneg %p191
        $region50: #{sgblock_forward.1} parent=47 // pred_check_branch
          %2535 = sbr.rel (%p2533) target = $region52
        $region51: #{sgblock_forward.1} parent=47 // pred_region
          %2537 = vsyncadd %s2529, 0
          %s2538 = smul.addr %s21, 8
          %s2539 = smul.addr %s2538, 8
          %s2540 = scalar_lea.hbm %s7, %s2539
          %s2541 = sshll.u32 %s2532, 4
          %s2542 = int_to_ptr.vmem [resolvable:$true] %s2541
          %s2543 = sshll.u32 %s2540, 4
          %s2544 = int_to_ptr.hbm [resolvable:$true] %s2543
          %2549 = dma.vmem_to_hbm [thread:$0]  %s2542, 1024, %s2544, %s2529, 128, 128, 8
        $region52: #{sgblock_forward.1} parent=47 // pred_fallthru
          _
      $region48: #{sgblock_forward.1} parent=5 // pred_fallthru
        _
      %p2550 = scmp.le.s32.totalorder 2, %s16
      // Predicated region
      $region53: #{sgblock_forward.1} parent=5 // pred_check
        %p2551 = pneg %p2550
      $region54: #{sgblock_forward.1} parent=5 // pred_check_branch
        %2553 = sbr.rel (%p2551) target = $region56
      $region55: #{sgblock_forward.1} parent=5 // pred_region
        %s2554 = ssub.s32 %s16, 2
        // Predicated region
        $region57: #{sgblock_forward.1} parent=55 // pred_check
          %p2555 = pneg %p197
        $region58: #{sgblock_forward.1} parent=55 // pred_check_branch
          %2557 = sbr.rel (%p2555) target = $region60
        $region59: #{sgblock_forward.1} parent=55 // pred_region
          %s2558 = sand.u32 %s182, 1
          %s2559 = scalar_lea.sflag [#allocation4], %s2558
          %s2560 = sand.u32 %s182, 1
          %s2561 = smul.addr %s2560, 64
          %s2562 = scalar_lea.vmem [#allocation3], %s2561
          %2564 = dma.done %s2559, 1024
        $region60: #{sgblock_forward.1} parent=55 // pred_fallthru
          _
      $region56: #{sgblock_forward.1} parent=5 // pred_fallthru
        _
    $region6: #{sgblock_forward.1} parent=1 // loop_footer
      %s20 = sadd.s32 1, %s16
    $region7: #{sgblock_forward.1} parent=1 // loop_footer_branch
      %15 = sbr.rel target = $region3
    $region8: #{sgblock_forward.1} parent=1 // loop_exit
      _
    %2565 = vsyncpa [#allocation4], 1
    %s2566 = scalar_lea.sflag [#allocation4], 1
    %2567 = vsyncpa %s2566, 1

</llo_original>
